<compile_context>
chip_gen: v6e
topology: v6e:2x2x1
jax: 0.10.0
libtpu: 0.0.40
codegen_flags: <defaults>
</compile_context>

<pallas_src>
import math
import numpy as np
import jax
import jax.numpy as jnp
from jax.experimental import pallas as pl
from jax.experimental.pallas import tpu as pltpu

# ----------------------- configuration (mirrors __init__) -----------------------
ANCHORS = [(116, 90), (156, 198), (373, 326),
           (30, 61), (62, 45), (59, 119),
           (10, 13), (16, 30), (33, 23)]
NUM_CLASSES = 1
IMG_SIZE = (512, 512)
IGNORE_THRESHOLD = 0.5
NUM_ANCHORS = len(ANCHORS)
BBOX_ATTRS = 5 + NUM_CLASSES                 # 6
NUM_POSES = 3
ATTRS = BBOX_ATTRS + NUM_POSES * 3           # 15 channels per anchor
FEATURE_LENGTH = [IMG_SIZE[0] // 32, IMG_SIZE[0] // 16, IMG_SIZE[0] // 8]
LAMBDA_XY, LAMBDA_WH, LAMBDA_CONF, LAMBDA_CLS = 1.0, 1.0, 1.0, 0.5
LAMBDA_YAW = LAMBDA_PITCH = LAMBDA_ROLL = 4.0 / 3.0
NORMALIZE = True
MAX_GT = 8                                    # padded GT boxes per image
NT = 6 + NUM_CLASSES + 2 + 9                  # rows in the packed target slab (=18)
NA = NUM_ANCHORS // 3                         # anchors per head (=3)
NOUT = 16                                     # padded number of loss rows (11 used)


# ----------------------------- host-side glue ----------------------------------
def _jaccard_np(box_a, box_b):
    """IoU of (cx,cy,w,h) boxes, (n,4) x (m,4) -> (n,m)."""
    ax1, ax2 = box_a[:, 0] - box_a[:, 2] / 2, box_a[:, 0] + box_a[:, 2] / 2
    ay1, ay2 = box_a[:, 1] - box_a[:, 3] / 2, box_a[:, 1] + box_a[:, 3] / 2
    bx1, bx2 = box_b[:, 0] - box_b[:, 2] / 2, box_b[:, 0] + box_b[:, 2] / 2
    by1, by2 = box_b[:, 1] - box_b[:, 3] / 2, box_b[:, 1] + box_b[:, 3] / 2
    iw = np.clip(np.minimum(ax2[:, None], bx2[None]) - np.maximum(ax1[:, None], bx1[None]), 0, None)
    ih = np.clip(np.minimum(ay2[:, None], by2[None]) - np.maximum(ay1[:, None], by1[None]), 0, None)
    inter = iw * ih
    area_a = (box_a[:, 2] * box_a[:, 3])[:, None]
    area_b = (box_b[:, 2] * box_b[:, 3])[None]
    return inter / (area_a + area_b - inter)


def get_target_np(targets, scaled_anchors, in_w, in_h):
    """Faithful NumPy port of YOLOLoss.get_target (data-dependent scatter -> host glue)."""
    # TODO(synk): per-box argmax + scatter assignment is inherently serial/ragged;
    #             it stays in NumPy glue rather than the Pallas kernel.
    bs = len(targets)
    li = FEATURE_LENGTH.index(in_w)
    anchor_index = [[0, 1, 2], [3, 4, 5], [6, 7, 8]][li]
    subtract_index = [0, 3, 6][li]
    shp = (bs, NA, in_h, in_w)
    mask = np.zeros(shp, np.float32); noobj = np.ones(shp, np.float32)
    tx = np.zeros(shp, np.float32); ty = np.zeros(shp, np.float32)
    tw = np.zeros(shp, np.float32); th = np.zeros(shp, np.float32)
    tconf = np.zeros(shp, np.float32)
    tcls = np.zeros(shp + (NUM_CLASSES,), np.float32)
    yaw = np.zeros(shp + (3,), np.float32)
    pitch = np.zeros(shp + (3,), np.float32)
    roll = np.zeros(shp + (3,), np.float32)
    blsx = np.zeros(shp, np.float32); blsy = np.zeros(shp, np.float32)

    anchors_np = np.asarray(scaled_anchors, np.float32)
    anchor_shapes = np.concatenate([np.zeros((NUM_ANCHORS, 2), np.float32), anchors_np], axis=1)

    for b in range(bs):
        t = np.asarray(targets[b], np.float32)
        if t.shape[0] == 0:
            continue
        gxs = t[:, 0] * in_w; gys = t[:, 1] * in_h
        gws = t[:, 2] * in_w; ghs = t[:, 3] * in_h
        gis = np.floor(gxs).astype(np.int64); gjs = np.floor(gys).astype(np.int64)
        gt_box = np.stack([np.zeros_like(gws), np.zeros_like(ghs), gws, ghs], axis=1)
        ious = _jaccard_np(gt_box, anchor_shapes)
        best_ns = np.argmax(ious, axis=-1)
        for i, best_n in enumerate(best_ns):
            if best_n not in anchor_index:
                continue
            gi, gj = int(gis[i]), int(gjs[i])
            if gj < in_h and gi < in_w:
                bn = int(best_n) - subtract_index
                noobj[b, bn, gj, gi] = 0
                mask[b, bn, gj, gi] = 1
                tx[b, bn, gj, gi] = gxs[i] - gi
                ty[b, bn, gj, gi] = gys[i] - gj
                tw[b, bn, gj, gi] = math.log(gws[i] / scaled_anchors[bn + subtract_index][0])
                th[b, bn, gj, gi] = math.log(ghs[i] / scaled_anchors[bn + subtract_index][1])
                blsx[b, bn, gj, gi] = t[i, 2]
                blsy[b, bn, gj, gi] = t[i, 3]
                tconf[b, bn, gj, gi] = 1
                tcls[b, bn, gj, gi, int(t[i, 4])] = 1
                yaw[b, bn, gj, gi, :] = t[i, 5:8]
                pitch[b, bn, gj, gi, :] = t[i, 8:11]
                roll[b, bn, gj, gi, :] = t[i, 11:14]
    return mask, noobj, tx, ty, tw, th, tconf, tcls, yaw, pitch, roll, blsx, blsy


def prepare_kernel_inputs(x, targets):
    bs, C, in_h, in_w = x.shape
    assert C == NA * ATTRS
    HW = in_h * in_w
    assert HW % 128 == 0, "spatial positions per anchor must be a multiple of 128"
    R = HW // 128
    stride_h = IMG_SIZE[1] / in_h
    stride_w = IMG_SIZE[0] / in_w
    scaled_anchors = [(aw / stride_w, ah / stride_h) for (aw, ah) in ANCHORS]
    li = FEATURE_LENGTH.index(in_w)
    anchor_index = [[0, 1, 2], [3, 4, 5], [6, 7, 8]][li]

    (mask, noobj, tx, ty, tw, th, _tconf, tcls, yaw, pitch, roll, blsx, blsy) = \
        get_target_np(targets, scaled_anchors, in_w, in_h)

    # -------- targets packed as (bs, 3, NT, R, 128) — native anchor-major order ----
    def flat(a):
        return a.reshape(bs, NA, HW)

    rows = [flat(mask), flat(noobj), flat(tx), flat(ty), flat(tw), flat(th)]
    for c in range(NUM_CLASSES):
        rows.append(tcls[..., c].reshape(bs, NA, HW))
    rows += [flat(blsx), flat(blsy)]
    for arr in (yaw, pitch, roll):
        for c in range(3):
            rows.append(arr[..., c].reshape(bs, NA, HW))
    tgt_arr = np.stack(rows, axis=2).reshape(bs, NA, NT, R, 128).astype(np.float32)

    # -------- aux rows per anchor: grid_x, grid_y, anchor_w, anchor_h  -> (3,4,R,128)
    ii = np.tile(np.arange(in_w, dtype=np.float32), in_h)        # grid_x over (j,i)
    jj = np.repeat(np.arange(in_h, dtype=np.float32), in_w)      # grid_y over (j,i)
    sel = np.asarray(scaled_anchors, np.float32)[anchor_index]   # (3, 2)
    aux = np.empty((NA, 4, HW), np.float32)
    aux[:, 0, :] = ii[None, :]
    aux[:, 1, :] = jj[None, :]
    aux[:, 2, :] = sel[:, 0:1]
    aux[:, 3, :] = sel[:, 1:2]
    aux = aux.reshape(NA, 4, R, 128)

    # -------- GT boxes in grid units, zero padded (zero-area boxes have no effect) --
    gt_arr = np.zeros((bs, MAX_GT, 4), np.float32)
    for b in range(bs):
        t = np.asarray(targets[b], np.float32)
        n = min(t.shape[0], MAX_GT)
        if n > 0:
            gt_arr[b, :n, 0] = t[:n, 0] * in_w
            gt_arr[b, :n, 1] = t[:n, 1] * in_h
            gt_arr[b, :n, 2] = t[:n, 2] * in_w
            gt_arr[b, :n, 3] = t[:n, 3] * in_h

    # NATIVE layout reshape only (no transpose, no extra HBM pass):
    #   (bs, 3*ATTRS, H, W) -> (bs, 3, ATTRS, R, 128)
    pred_k = jnp.reshape(x, (bs, NA, ATTRS, R, 128)).astype(jnp.float32)
    return pred_k, jnp.asarray(tgt_arr), jnp.asarray(aux), jnp.asarray(gt_arr)


# ------------------------------- Pallas kernel ----------------------------------
def _yolo_loss_kernel(pred_ref, tgt_ref, aux_ref, gt_ref, out_ref):
    a_id = pl.program_id(1)
    t_id = pl.program_id(2)
    nc = NUM_CLASSES

    # zero the per-batch accumulator block once (anchor 0, lane-tile 0)
    @pl.when(jnp.logical_and(a_id == 0, t_id == 0))
    def _():
        out_ref[...] = jnp.zeros_like(out_ref)

    p = pred_ref[0, 0]          # (ATTRS, RT, 128)   sublane/lane dense slices below
    t = tgt_ref[0, 0]           # (NT, RT, 128)
    aux = aux_ref[0]            # (4, RT, 128)
    gt = gt_ref[0]              # (MAX_GT, 4)

    px = p[0]; py = p[1]; pw = p[2]; ph = p[3]; pconf = p[4]    # raw logits (RT,128)
    pcls = p[5:5 + nc]                                          # (nc, RT, 128) logits
    po = 5 + nc                                                 # pose offset (nc-safe)
    pyaw = jnp.tanh(p[po:po + 3])
    ppitch = jnp.tanh(p[po + 3:po + 6])
    proll = jnp.tanh(p[po + 6:po + 9])

    mask = t[0]; noobj0 = t[1]
    tx_ = t[2]; ty_ = t[3]; tw_ = t[4]; th_ = t[5]
    tcls_ = t[6:6 + nc]
    blsx = t[6 + nc]; blsy = t[7 + nc]
    to = 8 + nc
    tyaw = t[to:to + 3]; tpitch = t[to + 3:to + 6]; troll = t[to + 6:to + 9]

    grid_x = aux[0]; grid_y = aux[1]; anch_w = aux[2]; anch_h = aux[3]

    # sigmoid only where the probability itself is needed (box decode)
    sx = jax.nn.sigmoid(px)
    sy = jax.nn.sigmoid(py)

    # ---- get_ignore: decode boxes, divide-free IoU-vs-GT threshold, update noobj ---
    bx = sx + grid_x
    by = sy + grid_y
    bw = jnp.exp(pw) * anch_w
    bh = jnp.exp(ph) * anch_h
    px1 = bx - bw * 0.5; px2 = bx + bw * 0.5
    py1 = by - bh * 0.5; py2 = by + bh * 0.5
    parea = bw * bh                                    # (RT, 128)

    gxc = gt[:, 0:1].reshape(MAX_GT, 1, 1)
    gyc = gt[:, 1:2].reshape(MAX_GT, 1, 1)
    gwb = gt[:, 2:3].reshape(MAX_GT, 1, 1)
    ghb = gt[:, 3:4].reshape(MAX_GT, 1, 1)
    gx1 = gxc - gwb * 0.5; gx2 = gxc + gwb * 0.5
    gy1 = gyc - ghb * 0.5; gy2 = gyc + ghb * 0.5
    garea = gwb * ghb

    iw = jnp.maximum(jnp.minimum(px2[None], gx2) - jnp.maximum(px1[None], gx1), 0.0)
    ih = jnp.maximum(jnp.minimum(py2[None], gy2) - jnp.maximum(py1[None], gy1), 0.0)
    inter = iw * ih                                    # (MAX_GT, RT, 128)
    union = parea[None] + garea - inter
    # iou > thr  <=>  inter > thr * union  (no division, no 0/0 on padded GT)
    over = jnp.max(jnp.where(inter > IGNORE_THRESHOLD * union, 1.0, 0.0), axis=0)
    noobj = jnp.where(over > 0.0, 0.0, noobj0)

    # ------------------------------- losses --------------------------------------
    def bce_logits(z, tgt):
        # BCE(sigmoid(z), tgt) in logit space: stable, 1 exp + 1 log, no clip.
        return jnp.maximum(z, 0.0) - z * tgt + jnp.log(1.0 + jnp.exp(-jnp.abs(z)))

    bls = 2.0 - blsx * blsy
    row_x = bce_logits(px, tx_) * bls * mask
    row_y = bce_logits(py, ty_) * bls * mask
    row_w = (pw - tw_) ** 2 * 0.5 * bls * mask
    row_h = (ph - th_) ** 2 * 0.5 * bls * mask
    row_conf = bce_logits(pconf, mask) * (mask + noobj)
    row_cls = jnp.sum(bce_logits(pcls, tcls_), axis=0) * mask
    row_yaw = jnp.sqrt(jnp.sum((pyaw - tyaw) ** 2, axis=0)) * mask
    row_pitch = jnp.sqrt(jnp.sum((ppitch - tpitch) ** 2, axis=0)) * mask
    row_roll = jnp.sqrt(jnp.sum((proll - troll) ** 2, axis=0)) * mask
    ortho = (jnp.abs(jnp.sum(pyaw * ppitch, axis=0))
             + jnp.abs(jnp.sum(ppitch * proll, axis=0))
             + jnp.abs(jnp.sum(proll * pyaw, axis=0)))
    row_ortho = ortho * mask

    # lane-dense accumulation: sublane-reduce each (RT,128) component to (1,128) and
    # add into the resident (1,16,128) output block (no concat, no narrow HBM store).
    partials = [row_x, row_y, row_w, row_h, row_conf, row_cls,
                row_yaw, row_pitch, row_roll, row_ortho, mask]
    for i, r in enumerate(partials):
        out_ref[0, i:i + 1, :] = out_ref[0, i:i + 1, :] + jnp.sum(r, axis=0, keepdims=True)


def run_yolo_loss_kernel(pred_k, tgt_arr, aux, gt_arr):
    bs, na, attrs, R, L = pred_k.shape
    assert na == NA and attrs == ATTRS and L == 128
    RT = R if R <= 8 else 8            # <= 8 sublanes x 128 lanes per attribute/step
    assert R % RT == 0
    n_tiles = R // RT
    return pl.pallas_call(
        _yolo_loss_kernel,
        out_shape=jax.ShapeDtypeStruct((bs, NOUT, 128), jnp.float32),
        grid_spec=pltpu.PrefetchScalarGridSpec(
            num_scalar_prefetch=0,
            grid=(bs, na, n_tiles),
            in_specs=[
                pl.BlockSpec((1, 1, attrs, RT, 128), lambda b, a, t: (b, a, 0, t, 0)),
                pl.BlockSpec((1, 1, NT, RT, 128), lambda b, a, t: (b, a, 0, t, 0)),
                pl.BlockSpec((1, 4, RT, 128), lambda b, a, t: (a, 0, t, 0)),
                pl.BlockSpec((1, MAX_GT, 4), lambda b, a, t: (b, 0, 0)),
            ],
            out_specs=pl.BlockSpec((1, NOUT, 128), lambda b, a, t: (b, 0, 0)),
        ),
        compiler_params=pltpu.CompilerParams(
            dimension_semantics=("parallel", "arbitrary", "arbitrary")),
    )(pred_k, tgt_arr, aux, gt_arr)


# --------------------------- pure-JAX reference ----------------------------------
# Uses the ORIGINAL formulation (clamped-sigmoid BCE, explicit IoU divide) to verify
# that the kernel's logit-BCE / divide-free-threshold rewrites preserve semantics.
def ref_components(pred_k, tgt_arr, aux, gt_arr):
    eps = 1e-7
    p = jnp.asarray(pred_k)           # (bs, 3, ATTRS, R, 128)
    t = jnp.asarray(tgt_arr)          # (bs, 3, NT, R, 128)
    aux = jnp.asarray(aux)            # (3, 4, R, 128)
    gt = jnp.asarray(gt_arr)          # (bs, MAX_GT, 4)
    nc = NUM_CLASSES
    sx = jax.nn.sigmoid(p[:, :, 0]); sy = jax.nn.sigmoid(p[:, :, 1])
    w = p[:, :, 2]; h = p[:, :, 3]
    conf = jax.nn.sigmoid(p[:, :, 4]); pcls = jax.nn.sigmoid(p[:, :, 5:5 + nc])
    po = 5 + nc
    pyaw = jnp.tanh(p[:, :, po:po + 3])
    ppitch = jnp.tanh(p[:, :, po + 3:po + 6])
    proll = jnp.tanh(p[:, :, po + 6:po + 9])
    mask = t[:, :, 0]; noobj0 = t[:, :, 1]
    tx_ = t[:, :, 2]; ty_ = t[:, :, 3]; tw_ = t[:, :, 4]; th_ = t[:, :, 5]
    tcls_ = t[:, :, 6:6 + nc]; blsx = t[:, :, 6 + nc]; blsy = t[:, :, 7 + nc]
    to = 8 + nc
    tyaw = t[:, :, to:to + 3]; tpitch = t[:, :, to + 3:to + 6]; troll = t[:, :, to + 6:to + 9]
    grid_x = aux[None, :, 0]; grid_y = aux[None, :, 1]
    anch_w = aux[None, :, 2]; anch_h = aux[None, :, 3]
    bx = sx + grid_x; by = sy + grid_y
    bw = jnp.exp(w) * anch_w; bh = jnp.exp(h) * anch_h
    px1, px2 = bx - bw / 2, bx + bw / 2
    py1, py2 = by - bh / 2, by + bh / 2
    parea = bw * bh
    gxc = gt[:, :, 0][:, :, None, None, None]
    gyc = gt[:, :, 1][:, :, None, None, None]
    gwb = gt[:, :, 2][:, :, None, None, None]
    ghb = gt[:, :, 3][:, :, None, None, None]
    gx1, gx2 = gxc - gwb / 2, gxc + gwb / 2
    gy1, gy2 = gyc - ghb / 2, gyc + ghb / 2
    garea = gwb * ghb
    iw = jnp.maximum(jnp.minimum(px2[:, None], gx2) - jnp.maximum(px1[:, None], gx1), 0.)
    ih = jnp.maximum(jnp.minimum(py2[:, None], gy2) - jnp.maximum(py1[:, None], gy1), 0.)
    inter = iw * ih
    iou = inter / (parea[:, None] + garea - inter)
    noobj = jnp.where(jnp.max(iou, axis=1) > IGNORE_THRESHOLD, 0., noobj0)

    def bce(a, b_):
        pc = jnp.clip(a, eps, 1 - eps)
        return -b_ * jnp.log(pc) - (1 - b_) * jnp.log(1 - pc)

    bls = 2.0 - blsx * blsy
    lx = jnp.sum(bce(sx, tx_) * bls * mask)
    ly = jnp.sum(bce(sy, ty_) * bls * mask)
    lw = jnp.sum((w - tw_) ** 2 * 0.5 * bls * mask)
    lh = jnp.sum((h - th_) ** 2 * 0.5 * bls * mask)
    bc = bce(conf, mask)
    lconf = jnp.sum(bc * mask) + jnp.sum(bc * noobj)
    lcls = jnp.sum(bce(pcls, tcls_) * mask[:, :, None])
    lyaw = jnp.sum(jnp.sqrt(jnp.sum((pyaw - tyaw) ** 2, axis=2)) * mask)
    lpitch = jnp.sum(jnp.sqrt(jnp.sum((ppitch - tpitch) ** 2, axis=2)) * mask)
    lroll = jnp.sum(jnp.sqrt(jnp.sum((proll - troll) ** 2, axis=2)) * mask)
    ortho = (jnp.abs(jnp.sum(pyaw * ppitch, axis=2))
             + jnp.abs(jnp.sum(ppitch * proll, axis=2))
             + jnp.abs(jnp.sum(proll * pyaw, axis=2)))
    lortho = jnp.sum(ortho * mask)
    npos = jnp.sum(mask)
    return jnp.stack([lx, ly, lw, lh, lconf, lcls, lyaw, lpitch, lroll, lortho, npos])


# ------------------------------ forward wrapper ----------------------------------
def yolo_loss_forward(x, targets):
    bs = x.shape[0]
    pred_k, tgt_arr, aux, gt_arr = prepare_kernel_inputs(x, targets)
    out = run_yolo_loss_kernel(pred_k, tgt_arr, aux, gt_arr)
    jax.block_until_ready(out)
    comps = np.asarray(out).sum(axis=(0, 2))          # reduce (bs,16,128) -> (16,)
    (lx, ly, lw, lh, lconf, lcls, lyaw, lpitch, lroll, lortho, sum_mask) = \
        [float(v) for v in comps[:11]]
    num_pos = max(sum_mask, 1.0) if NORMALIZE else bs / 3
    losses = {
        'x': lx / bs, 'y': ly / bs, 'w': lw / bs, 'h': lh / bs,
        'confidence': lconf / bs, 'class': lcls / bs,
        'yaw': lyaw / bs, 'pitch': lpitch / bs, 'roll': lroll / bs, 'ortho': lortho / bs,
        'bbox attr': LAMBDA_XY * (lx + ly) + LAMBDA_WH * (lw + lh)
                     + LAMBDA_CONF * lconf + LAMBDA_CLS * lcls,
        'poses': LAMBDA_YAW * lyaw + LAMBDA_PITCH * lpitch + LAMBDA_ROLL * lroll + lortho,
    }
    return losses, num_pos, out, (pred_k, tgt_arr, aux, gt_arr)


# ------------------------------------ main ---------------------------------------
if __name__ == "__main__":
    key = jax.random.PRNGKey(0)
    bs, in_h, in_w = 2, 16, 16                    # stride-32 head of a 512x512 image
    x = jax.random.normal(key, (bs, NA * ATTRS, in_h, in_w), dtype=jnp.float32)

    # targets[b]: (num_gt, 14) = [cx, cy, w, h (normalized), class, yaw(3), pitch(3), roll(3)]
    targets = [
        np.array([[0.30, 0.40, 0.25, 0.30, 0, 0.80, 0.10, -0.20, -0.10, 0.90, 0.30, 0.20, -0.30, 0.85],
                  [0.70, 0.60, 0.50, 0.45, 0, 0.60, 0.50, 0.30, -0.40, 0.70, 0.20, 0.10, 0.20, 0.90]],
                 dtype=np.float32),
        np.array([[0.55, 0.25, 0.40, 0.60, 0, 0.90, 0.00, 0.10, 0.00, 0.95, 0.10, -0.10, 0.10, 0.92]],
                 dtype=np.float32),
    ]

    losses, num_pos, out, (pred_k, tgt_arr, aux, gt_arr) = yolo_loss_forward(x, targets)

    # correctness check against a pure-JAX reference using the original formulation
    ref = np.asarray(ref_components(pred_k, tgt_arr, aux, gt_arr))
    got = np.asarray(out).sum(axis=(0, 2))[:11]
    np.testing.assert_allclose(got, ref, rtol=5e-3, atol=1e-3)

    print("KERNEL_OK")
</pallas_src>

<mosaic_0001>
module attributes {stable_mosaic.version = 11 : i64} {
  func.func @_yolo_loss_kernel(%arg0: i32, %arg1: i32, %arg2: i32, %arg3: memref<1x1x15x2x128xf32, #tpu.memory_space<vmem>>, %arg4: memref<1x1x18x2x128xf32, #tpu.memory_space<vmem>>, %arg5: memref<1x4x2x128xf32, #tpu.memory_space<vmem>>, %arg6: memref<1x8x4xf32, #tpu.memory_space<vmem>>, %arg7: memref<1x16x128xf32, #tpu.memory_space<vmem>>) attributes {dimension_semantics = [#tpu.dimension_semantics<parallel>, #tpu.dimension_semantics<arbitrary>, #tpu.dimension_semantics<arbitrary>], iteration_bounds = array<i64: 2, 3, 1>, scalar_prefetch = 0 : i64, scratch_operands = 0 : i64, tpu.core_type = #tpu.core_type<tc>, window_params = [{transform_indices = @transform_0, window_bounds = array<i64: 1, 1, 15, 2, 128>}, {transform_indices = @transform_1, window_bounds = array<i64: 1, 1, 18, 2, 128>}, {transform_indices = @transform_2, window_bounds = array<i64: 1, 4, 2, 128>}, {transform_indices = @transform_3, window_bounds = array<i64: 1, 8, 4>}, {transform_indices = @transform_4, window_bounds = array<i64: 1, 16, 128>}]} {
    %c0_i32 = arith.constant 0 : i32
    %0 = arith.cmpi eq, %arg1, %c0_i32 : i32
    %c0_i32_0 = arith.constant 0 : i32
    %1 = arith.cmpi eq, %arg2, %c0_i32_0 : i32
    %2 = arith.andi %0, %1 : i1
    %3 = arith.extui %2 : i1 to i32
    %c0_i32_1 = arith.constant 0 : i32
    %4 = arith.cmpi ne, %3, %c0_i32_1 : i32
    scf.if %4 {
      %cst_124 = arith.constant 0.000000e+00 : f32
      %333 = vector.broadcast %cst_124 : f32 to vector<1x16x128xf32>
      %c0_125 = arith.constant 0 : index
      %c0_126 = arith.constant 0 : index
      %c0_127 = arith.constant 0 : index
      %334 = vector.load %arg7[%c0_125, %c0_126, %c0_127] : memref<1x16x128xf32, #tpu.memory_space<vmem>>, vector<1x16x128xf32>
      tpu.vector_store %arg7[%c0_125, %c0_126, %c0_127], %333 {strides = array<i32>} : memref<1x16x128xf32, #tpu.memory_space<vmem>>, vector<1x16x128xf32>,
    } else {
    }
    %c0 = arith.constant 0 : index
    %c0_2 = arith.constant 0 : index
    %c0_3 = arith.constant 0 : index
    %c0_4 = arith.constant 0 : index
    %c0_5 = arith.constant 0 : index
    %5 = vector.load %arg3[%c0, %c0_2, %c0_3, %c0_4, %c0_5] : memref<1x1x15x2x128xf32, #tpu.memory_space<vmem>>, vector<1x1x15x2x128xf32>
    %6 = vector.shape_cast %5 : vector<1x1x15x2x128xf32> to vector<15x2x128xf32>
    %c0_6 = arith.constant 0 : index
    %c0_7 = arith.constant 0 : index
    %c0_8 = arith.constant 0 : index
    %c0_9 = arith.constant 0 : index
    %c0_10 = arith.constant 0 : index
    %7 = vector.load %arg4[%c0_6, %c0_7, %c0_8, %c0_9, %c0_10] : memref<1x1x18x2x128xf32, #tpu.memory_space<vmem>>, vector<1x1x18x2x128xf32>
    %8 = vector.shape_cast %7 : vector<1x1x18x2x128xf32> to vector<18x2x128xf32>
    %c0_11 = arith.constant 0 : index
    %c0_12 = arith.constant 0 : index
    %c0_13 = arith.constant 0 : index
    %c0_14 = arith.constant 0 : index
    %9 = vector.load %arg5[%c0_11, %c0_12, %c0_13, %c0_14] : memref<1x4x2x128xf32, #tpu.memory_space<vmem>>, vector<1x4x2x128xf32>
    %10 = vector.shape_cast %9 : vector<1x4x2x128xf32> to vector<4x2x128xf32>
    %c0_15 = arith.constant 0 : index
    %c0_16 = arith.constant 0 : index
    %c0_17 = arith.constant 0 : index
    %11 = vector.load %arg6[%c0_15, %c0_16, %c0_17] : memref<1x8x4xf32, #tpu.memory_space<vmem>>, vector<1x8x4xf32>
    %12 = vector.shape_cast %11 : vector<1x8x4xf32> to vector<8x4xf32>
    %13 = vector.extract_strided_slice %6 {offsets = [0, 0, 0], sizes = [1, 2, 128], strides = [1, 1, 1]} : vector<15x2x128xf32> to vector<1x2x128xf32>
    %14 = vector.shape_cast %13 : vector<1x2x128xf32> to vector<2x128xf32>
    %15 = vector.extract_strided_slice %6 {offsets = [1, 0, 0], sizes = [1, 2, 128], strides = [1, 1, 1]} : vector<15x2x128xf32> to vector<1x2x128xf32>
    %16 = vector.shape_cast %15 : vector<1x2x128xf32> to vector<2x128xf32>
    %17 = vector.extract_strided_slice %6 {offsets = [2, 0, 0], sizes = [1, 2, 128], strides = [1, 1, 1]} : vector<15x2x128xf32> to vector<1x2x128xf32>
    %18 = vector.shape_cast %17 : vector<1x2x128xf32> to vector<2x128xf32>
    %19 = vector.extract_strided_slice %6 {offsets = [3, 0, 0], sizes = [1, 2, 128], strides = [1, 1, 1]} : vector<15x2x128xf32> to vector<1x2x128xf32>
    %20 = vector.shape_cast %19 : vector<1x2x128xf32> to vector<2x128xf32>
    %21 = vector.extract_strided_slice %6 {offsets = [4, 0, 0], sizes = [1, 2, 128], strides = [1, 1, 1]} : vector<15x2x128xf32> to vector<1x2x128xf32>
    %22 = vector.shape_cast %21 : vector<1x2x128xf32> to vector<2x128xf32>
    %23 = vector.extract_strided_slice %6 {offsets = [5, 0, 0], sizes = [1, 2, 128], strides = [1, 1, 1]} : vector<15x2x128xf32> to vector<1x2x128xf32>
    %24 = vector.extract_strided_slice %6 {offsets = [6, 0, 0], sizes = [3, 2, 128], strides = [1, 1, 1]} : vector<15x2x128xf32> to vector<3x2x128xf32>
    %25 = math.tanh %24 : vector<3x2x128xf32>
    %26 = vector.extract_strided_slice %6 {offsets = [9, 0, 0], sizes = [3, 2, 128], strides = [1, 1, 1]} : vector<15x2x128xf32> to vector<3x2x128xf32>
    %27 = math.tanh %26 : vector<3x2x128xf32>
    %28 = vector.extract_strided_slice %6 {offsets = [12, 0, 0], sizes = [3, 2, 128], strides = [1, 1, 1]} : vector<15x2x128xf32> to vector<3x2x128xf32>
    %29 = math.tanh %28 : vector<3x2x128xf32>
    %30 = vector.extract_strided_slice %8 {offsets = [0, 0, 0], sizes = [1, 2, 128], strides = [1, 1, 1]} : vector<18x2x128xf32> to vector<1x2x128xf32>
    %31 = vector.shape_cast %30 : vector<1x2x128xf32> to vector<2x128xf32>
    %32 = vector.extract_strided_slice %8 {offsets = [1, 0, 0], sizes = [1, 2, 128], strides = [1, 1, 1]} : vector<18x2x128xf32> to vector<1x2x128xf32>
    %33 = vector.shape_cast %32 : vector<1x2x128xf32> to vector<2x128xf32>
    %34 = vector.extract_strided_slice %8 {offsets = [2, 0, 0], sizes = [1, 2, 128], strides = [1, 1, 1]} : vector<18x2x128xf32> to vector<1x2x128xf32>
    %35 = vector.shape_cast %34 : vector<1x2x128xf32> to vector<2x128xf32>
    %36 = vector.extract_strided_slice %8 {offsets = [3, 0, 0], sizes = [1, 2, 128], strides = [1, 1, 1]} : vector<18x2x128xf32> to vector<1x2x128xf32>
    %37 = vector.shape_cast %36 : vector<1x2x128xf32> to vector<2x128xf32>
    %38 = vector.extract_strided_slice %8 {offsets = [4, 0, 0], sizes = [1, 2, 128], strides = [1, 1, 1]} : vector<18x2x128xf32> to vector<1x2x128xf32>
    %39 = vector.shape_cast %38 : vector<1x2x128xf32> to vector<2x128xf32>
    %40 = vector.extract_strided_slice %8 {offsets = [5, 0, 0], sizes = [1, 2, 128], strides = [1, 1, 1]} : vector<18x2x128xf32> to vector<1x2x128xf32>
    %41 = vector.shape_cast %40 : vector<1x2x128xf32> to vector<2x128xf32>
    %42 = vector.extract_strided_slice %8 {offsets = [6, 0, 0], sizes = [1, 2, 128], strides = [1, 1, 1]} : vector<18x2x128xf32> to vector<1x2x128xf32>
    %43 = vector.extract_strided_slice %8 {offsets = [7, 0, 0], sizes = [1, 2, 128], strides = [1, 1, 1]} : vector<18x2x128xf32> to vector<1x2x128xf32>
    %44 = vector.shape_cast %43 : vector<1x2x128xf32> to vector<2x128xf32>
    %45 = vector.extract_strided_slice %8 {offsets = [8, 0, 0], sizes = [1, 2, 128], strides = [1, 1, 1]} : vector<18x2x128xf32> to vector<1x2x128xf32>
    %46 = vector.shape_cast %45 : vector<1x2x128xf32> to vector<2x128xf32>
    %47 = vector.extract_strided_slice %8 {offsets = [9, 0, 0], sizes = [3, 2, 128], strides = [1, 1, 1]} : vector<18x2x128xf32> to vector<3x2x128xf32>
    %48 = vector.extract_strided_slice %8 {offsets = [12, 0, 0], sizes = [3, 2, 128], strides = [1, 1, 1]} : vector<18x2x128xf32> to vector<3x2x128xf32>
    %49 = vector.extract_strided_slice %8 {offsets = [15, 0, 0], sizes = [3, 2, 128], strides = [1, 1, 1]} : vector<18x2x128xf32> to vector<3x2x128xf32>
    %50 = vector.extract_strided_slice %10 {offsets = [0, 0, 0], sizes = [1, 2, 128], strides = [1, 1, 1]} : vector<4x2x128xf32> to vector<1x2x128xf32>
    %51 = vector.shape_cast %50 : vector<1x2x128xf32> to vector<2x128xf32>
    %52 = vector.extract_strided_slice %10 {offsets = [1, 0, 0], sizes = [1, 2, 128], strides = [1, 1, 1]} : vector<4x2x128xf32> to vector<1x2x128xf32>
    %53 = vector.shape_cast %52 : vector<1x2x128xf32> to vector<2x128xf32>
    %54 = vector.extract_strided_slice %10 {offsets = [2, 0, 0], sizes = [1, 2, 128], strides = [1, 1, 1]} : vector<4x2x128xf32> to vector<1x2x128xf32>
    %55 = vector.shape_cast %54 : vector<1x2x128xf32> to vector<2x128xf32>
    %56 = vector.extract_strided_slice %10 {offsets = [3, 0, 0], sizes = [1, 2, 128], strides = [1, 1, 1]} : vector<4x2x128xf32> to vector<1x2x128xf32>
    %57 = vector.shape_cast %56 : vector<1x2x128xf32> to vector<2x128xf32>
    %58 = arith.negf %14 : vector<2x128xf32>
    %59 = math.exp %58 : vector<2x128xf32>
    %cst = arith.constant 1.000000e+00 : f32
    %60 = vector.broadcast %cst : f32 to vector<2x128xf32>
    %61 = arith.addf %60, %59 : vector<2x128xf32>
    %62 = arith.divf %60, %61 : vector<2x128xf32>
    %63 = arith.negf %16 : vector<2x128xf32>
    %64 = math.exp %63 : vector<2x128xf32>
    %cst_18 = arith.constant 1.000000e+00 : f32
    %65 = vector.broadcast %cst_18 : f32 to vector<2x128xf32>
    %66 = arith.addf %65, %64 : vector<2x128xf32>
    %67 = arith.divf %65, %66 : vector<2x128xf32>
    %68 = arith.addf %62, %51 : vector<2x128xf32>
    %69 = arith.addf %67, %53 : vector<2x128xf32>
    %70 = math.exp %18 : vector<2x128xf32>
    %71 = arith.mulf %70, %55 : vector<2x128xf32>
    %72 = math.exp %20 : vector<2x128xf32>
    %73 = arith.mulf %72, %57 : vector<2x128xf32>
    %cst_19 = arith.constant 5.000000e-01 : f32
    %74 = vector.broadcast %cst_19 : f32 to vector<2x128xf32>
    %75 = arith.mulf %71, %74 : vector<2x128xf32>
    %76 = arith.subf %68, %75 : vector<2x128xf32>
    %cst_20 = arith.constant 5.000000e-01 : f32
    %77 = vector.broadcast %cst_20 : f32 to vector<2x128xf32>
    %78 = arith.mulf %71, %77 : vector<2x128xf32>
    %79 = arith.addf %68, %78 : vector<2x128xf32>
    %cst_21 = arith.constant 5.000000e-01 : f32
    %80 = vector.broadcast %cst_21 : f32 to vector<2x128xf32>
    %81 = arith.mulf %73, %80 : vector<2x128xf32>
    %82 = arith.subf %69, %81 : vector<2x128xf32>
    %cst_22 = arith.constant 5.000000e-01 : f32
    %83 = vector.broadcast %cst_22 : f32 to vector<2x128xf32>
    %84 = arith.mulf %73, %83 : vector<2x128xf32>
    %85 = arith.addf %69, %84 : vector<2x128xf32>
    %86 = arith.mulf %71, %73 : vector<2x128xf32>
    %87 = vector.extract_strided_slice %12 {offsets = [0, 0], sizes = [8, 1], strides = [1, 1]} : vector<8x4xf32> to vector<8x1xf32>
    %88 = vector.shape_cast %87 : vector<8x1xf32> to vector<8x1x1xf32>
    %89 = vector.extract_strided_slice %12 {offsets = [0, 1], sizes = [8, 1], strides = [1, 1]} : vector<8x4xf32> to vector<8x1xf32>
    %90 = vector.shape_cast %89 : vector<8x1xf32> to vector<8x1x1xf32>
    %91 = vector.extract_strided_slice %12 {offsets = [0, 2], sizes = [8, 1], strides = [1, 1]} : vector<8x4xf32> to vector<8x1xf32>
    %92 = vector.shape_cast %91 : vector<8x1xf32> to vector<8x1x1xf32>
    %93 = vector.extract_strided_slice %12 {offsets = [0, 3], sizes = [8, 1], strides = [1, 1]} : vector<8x4xf32> to vector<8x1xf32>
    %94 = vector.shape_cast %93 : vector<8x1xf32> to vector<8x1x1xf32>
    %cst_23 = arith.constant 5.000000e-01 : f32
    %95 = vector.broadcast %cst_23 : f32 to vector<8x1x1xf32>
    %96 = arith.mulf %92, %95 : vector<8x1x1xf32>
    %97 = arith.subf %88, %96 : vector<8x1x1xf32>
    %cst_24 = arith.constant 5.000000e-01 : f32
    %98 = vector.broadcast %cst_24 : f32 to vector<8x1x1xf32>
    %99 = arith.mulf %92, %98 : vector<8x1x1xf32>
    %100 = arith.addf %88, %99 : vector<8x1x1xf32>
    %cst_25 = arith.constant 5.000000e-01 : f32
    %101 = vector.broadcast %cst_25 : f32 to vector<8x1x1xf32>
    %102 = arith.mulf %94, %101 : vector<8x1x1xf32>
    %103 = arith.subf %90, %102 : vector<8x1x1xf32>
    %cst_26 = arith.constant 5.000000e-01 : f32
    %104 = vector.broadcast %cst_26 : f32 to vector<8x1x1xf32>
    %105 = arith.mulf %94, %104 : vector<8x1x1xf32>
    %106 = arith.addf %90, %105 : vector<8x1x1xf32>
    %107 = arith.mulf %92, %94 : vector<8x1x1xf32>
    %108 = vector.shape_cast %79 : vector<2x128xf32> to vector<1x2x128xf32>
    %109 = vector.broadcast %108 : vector<1x2x128xf32> to vector<8x2x128xf32>
    %110 = vector.broadcast %100 : vector<8x1x1xf32> to vector<8x2x128xf32>
    %111 = arith.minimumf %109, %110 : vector<8x2x128xf32>
    %112 = vector.shape_cast %76 : vector<2x128xf32> to vector<1x2x128xf32>
    %113 = vector.broadcast %112 : vector<1x2x128xf32> to vector<8x2x128xf32>
    %114 = vector.broadcast %97 : vector<8x1x1xf32> to vector<8x2x128xf32>
    %115 = arith.maximumf %113, %114 : vector<8x2x128xf32>
    %116 = arith.subf %111, %115 : vector<8x2x128xf32>
    %cst_27 = arith.constant 0.000000e+00 : f32
    %117 = vector.broadcast %cst_27 : f32 to vector<8x2x128xf32>
    %118 = arith.maximumf %116, %117 : vector<8x2x128xf32>
    %119 = vector.shape_cast %85 : vector<2x128xf32> to vector<1x2x128xf32>
    %120 = vector.broadcast %119 : vector<1x2x128xf32> to vector<8x2x128xf32>
    %121 = vector.broadcast %106 : vector<8x1x1xf32> to vector<8x2x128xf32>
    %122 = arith.minimumf %120, %121 : vector<8x2x128xf32>
    %123 = vector.shape_cast %82 : vector<2x128xf32> to vector<1x2x128xf32>
    %124 = vector.broadcast %123 : vector<1x2x128xf32> to vector<8x2x128xf32>
    %125 = vector.broadcast %103 : vector<8x1x1xf32> to vector<8x2x128xf32>
    %126 = arith.maximumf %124, %125 : vector<8x2x128xf32>
    %127 = arith.subf %122, %126 : vector<8x2x128xf32>
    %cst_28 = arith.constant 0.000000e+00 : f32
    %128 = vector.broadcast %cst_28 : f32 to vector<8x2x128xf32>
    %129 = arith.maximumf %127, %128 : vector<8x2x128xf32>
    %130 = arith.mulf %118, %129 : vector<8x2x128xf32>
    %131 = vector.shape_cast %86 : vector<2x128xf32> to vector<1x2x128xf32>
    %132 = vector.broadcast %131 : vector<1x2x128xf32> to vector<8x2x128xf32>
    %133 = vector.broadcast %107 : vector<8x1x1xf32> to vector<8x2x128xf32>
    %134 = arith.addf %132, %133 : vector<8x2x128xf32>
    %135 = arith.subf %134, %130 : vector<8x2x128xf32>
    %cst_29 = arith.constant 5.000000e-01 : f32
    %136 = vector.broadcast %cst_29 : f32 to vector<8x2x128xf32>
    %137 = arith.mulf %136, %135 : vector<8x2x128xf32>
    %138 = arith.cmpf ogt, %130, %137 : vector<8x2x128xf32>
    %cst_30 = arith.constant 1.000000e+00 : f32
    %cst_31 = arith.constant 0.000000e+00 : f32
    %139 = vector.broadcast %cst_30 : f32 to vector<8x2x128xf32>
    %140 = vector.broadcast %cst_31 : f32 to vector<8x2x128xf32>
    %141 = arith.select %138, %139, %140 : vector<8x2x128xi1>, vector<8x2x128xf32>
    %cst_32 = arith.constant dense<0xFF800000> : vector<2x128xf32>
    %142 = vector.multi_reduction <maximumf>, %141, %cst_32 [0] : vector<8x2x128xf32> to vector<2x128xf32>
    %cst_33 = arith.constant 0.000000e+00 : f32
    %143 = vector.broadcast %cst_33 : f32 to vector<2x128xf32>
    %144 = arith.cmpf ogt, %142, %143 : vector<2x128xf32>
    %cst_34 = arith.constant 0.000000e+00 : f32
    %145 = vector.broadcast %cst_34 : f32 to vector<2x128xf32>
    %146 = arith.select %144, %145, %33 : vector<2x128xi1>, vector<2x128xf32>
    %147 = arith.mulf %44, %46 : vector<2x128xf32>
    %cst_35 = arith.constant 2.000000e+00 : f32
    %148 = vector.broadcast %cst_35 : f32 to vector<2x128xf32>
    %149 = arith.subf %148, %147 : vector<2x128xf32>
    %cst_36 = arith.constant 0.000000e+00 : f32
    %150 = vector.broadcast %cst_36 : f32 to vector<2x128xf32>
    %151 = arith.maximumf %14, %150 : vector<2x128xf32>
    %152 = arith.mulf %14, %35 : vector<2x128xf32>
    %153 = arith.subf %151, %152 : vector<2x128xf32>
    %154 = math.absf %14 : vector<2x128xf32>
    %cst_37 = arith.constant 0.000000e+00 : f32
    %155 = vector.broadcast %cst_37 : f32 to vector<2x128xf32>
    %156 = arith.subf %155, %154 : vector<2x128xf32>
    %157 = math.exp %156 : vector<2x128xf32>
    %cst_38 = arith.constant 1.000000e+00 : f32
    %158 = vector.broadcast %cst_38 : f32 to vector<2x128xf32>
    %159 = arith.addf %158, %157 : vector<2x128xf32>
    %160 = math.log %159 : vector<2x128xf32>
    %161 = arith.addf %153, %160 : vector<2x128xf32>
    %162 = arith.mulf %161, %149 : vector<2x128xf32>
    %163 = arith.mulf %162, %31 : vector<2x128xf32>
    %cst_39 = arith.constant 0.000000e+00 : f32
    %164 = vector.broadcast %cst_39 : f32 to vector<2x128xf32>
    %165 = arith.maximumf %16, %164 : vector<2x128xf32>
    %166 = arith.mulf %16, %37 : vector<2x128xf32>
    %167 = arith.subf %165, %166 : vector<2x128xf32>
    %168 = math.absf %16 : vector<2x128xf32>
    %cst_40 = arith.constant 0.000000e+00 : f32
    %169 = vector.broadcast %cst_40 : f32 to vector<2x128xf32>
    %170 = arith.subf %169, %168 : vector<2x128xf32>
    %171 = math.exp %170 : vector<2x128xf32>
    %cst_41 = arith.constant 1.000000e+00 : f32
    %172 = vector.broadcast %cst_41 : f32 to vector<2x128xf32>
    %173 = arith.addf %172, %171 : vector<2x128xf32>
    %174 = math.log %173 : vector<2x128xf32>
    %175 = arith.addf %167, %174 : vector<2x128xf32>
    %176 = arith.mulf %175, %149 : vector<2x128xf32>
    %177 = arith.mulf %176, %31 : vector<2x128xf32>
    %178 = arith.subf %18, %39 : vector<2x128xf32>
    %179 = arith.mulf %178, %178 : vector<2x128xf32>
    %cst_42 = arith.constant 5.000000e-01 : f32
    %180 = vector.broadcast %cst_42 : f32 to vector<2x128xf32>
    %181 = arith.mulf %179, %180 : vector<2x128xf32>
    %182 = arith.mulf %181, %149 : vector<2x128xf32>
    %183 = arith.mulf %182, %31 : vector<2x128xf32>
    %184 = arith.subf %20, %41 : vector<2x128xf32>
    %185 = arith.mulf %184, %184 : vector<2x128xf32>
    %cst_43 = arith.constant 5.000000e-01 : f32
    %186 = vector.broadcast %cst_43 : f32 to vector<2x128xf32>
    %187 = arith.mulf %185, %186 : vector<2x128xf32>
    %188 = arith.mulf %187, %149 : vector<2x128xf32>
    %189 = arith.mulf %188, %31 : vector<2x128xf32>
    %cst_44 = arith.constant 0.000000e+00 : f32
    %190 = vector.broadcast %cst_44 : f32 to vector<2x128xf32>
    %191 = arith.maximumf %22, %190 : vector<2x128xf32>
    %192 = arith.mulf %22, %31 : vector<2x128xf32>
    %193 = arith.subf %191, %192 : vector<2x128xf32>
    %194 = math.absf %22 : vector<2x128xf32>
    %cst_45 = arith.constant 0.000000e+00 : f32
    %195 = vector.broadcast %cst_45 : f32 to vector<2x128xf32>
    %196 = arith.subf %195, %194 : vector<2x128xf32>
    %197 = math.exp %196 : vector<2x128xf32>
    %cst_46 = arith.constant 1.000000e+00 : f32
    %198 = vector.broadcast %cst_46 : f32 to vector<2x128xf32>
    %199 = arith.addf %198, %197 : vector<2x128xf32>
    %200 = math.log %199 : vector<2x128xf32>
    %201 = arith.addf %193, %200 : vector<2x128xf32>
    %202 = arith.addf %31, %146 : vector<2x128xf32>
    %203 = arith.mulf %201, %202 : vector<2x128xf32>
    %cst_47 = arith.constant 0.000000e+00 : f32
    %204 = vector.broadcast %cst_47 : f32 to vector<1x2x128xf32>
    %205 = arith.maximumf %23, %204 : vector<1x2x128xf32>
    %206 = arith.mulf %23, %42 : vector<1x2x128xf32>
    %207 = arith.subf %205, %206 : vector<1x2x128xf32>
    %208 = math.absf %23 : vector<1x2x128xf32>
    %cst_48 = arith.constant 0.000000e+00 : f32
    %209 = vector.broadcast %cst_48 : f32 to vector<1x2x128xf32>
    %210 = arith.subf %209, %208 : vector<1x2x128xf32>
    %211 = math.exp %210 : vector<1x2x128xf32>
    %cst_49 = arith.constant 1.000000e+00 : f32
    %212 = vector.broadcast %cst_49 : f32 to vector<1x2x128xf32>
    %213 = arith.addf %212, %211 : vector<1x2x128xf32>
    %214 = math.log %213 : vector<1x2x128xf32>
    %215 = arith.addf %207, %214 : vector<1x2x128xf32>
    %cst_50 = arith.constant dense<0.000000e+00> : vector<2x128xf32>
    %216 = vector.multi_reduction <add>, %215, %cst_50 [0] : vector<1x2x128xf32> to vector<2x128xf32>
    %217 = arith.mulf %216, %31 : vector<2x128xf32>
    %218 = arith.subf %25, %47 : vector<3x2x128xf32>
    %219 = arith.mulf %218, %218 : vector<3x2x128xf32>
    %cst_51 = arith.constant dense<0.000000e+00> : vector<2x128xf32>
    %220 = vector.multi_reduction <add>, %219, %cst_51 [0] : vector<3x2x128xf32> to vector<2x128xf32>
    %221 = math.sqrt %220 : vector<2x128xf32>
    %222 = arith.mulf %221, %31 : vector<2x128xf32>
    %223 = arith.subf %27, %48 : vector<3x2x128xf32>
    %224 = arith.mulf %223, %223 : vector<3x2x128xf32>
    %cst_52 = arith.constant dense<0.000000e+00> : vector<2x128xf32>
    %225 = vector.multi_reduction <add>, %224, %cst_52 [0] : vector<3x2x128xf32> to vector<2x128xf32>
    %226 = math.sqrt %225 : vector<2x128xf32>
    %227 = arith.mulf %226, %31 : vector<2x128xf32>
    %228 = arith.subf %29, %49 : vector<3x2x128xf32>
    %229 = arith.mulf %228, %228 : vector<3x2x128xf32>
    %cst_53 = arith.constant dense<0.000000e+00> : vector<2x128xf32>
    %230 = vector.multi_reduction <add>, %229, %cst_53 [0] : vector<3x2x128xf32> to vector<2x128xf32>
    %231 = math.sqrt %230 : vector<2x128xf32>
    %232 = arith.mulf %231, %31 : vector<2x128xf32>
    %233 = arith.mulf %25, %27 : vector<3x2x128xf32>
    %cst_54 = arith.constant dense<0.000000e+00> : vector<2x128xf32>
    %234 = vector.multi_reduction <add>, %233, %cst_54 [0] : vector<3x2x128xf32> to vector<2x128xf32>
    %235 = math.absf %234 : vector<2x128xf32>
    %236 = arith.mulf %27, %29 : vector<3x2x128xf32>
    %cst_55 = arith.constant dense<0.000000e+00> : vector<2x128xf32>
    %237 = vector.multi_reduction <add>, %236, %cst_55 [0] : vector<3x2x128xf32> to vector<2x128xf32>
    %238 = math.absf %237 : vector<2x128xf32>
    %239 = arith.addf %235, %238 : vector<2x128xf32>
    %240 = arith.mulf %29, %25 : vector<3x2x128xf32>
    %cst_56 = arith.constant dense<0.000000e+00> : vector<2x128xf32>
    %241 = vector.multi_reduction <add>, %240, %cst_56 [0] : vector<3x2x128xf32> to vector<2x128xf32>
    %242 = math.absf %241 : vector<2x128xf32>
    %243 = arith.addf %239, %242 : vector<2x128xf32>
    %244 = arith.mulf %243, %31 : vector<2x128xf32>
    %c0_57 = arith.constant 0 : index
    %c0_58 = arith.constant 0 : index
    %c0_59 = arith.constant 0 : index
    %245 = vector.load %arg7[%c0_57, %c0_58, %c0_59] : memref<1x16x128xf32, #tpu.memory_space<vmem>>, vector<1x1x128xf32>
    %246 = vector.shape_cast %245 : vector<1x1x128xf32> to vector<1x128xf32>
    %cst_60 = arith.constant dense<0.000000e+00> : vector<128xf32>
    %247 = vector.multi_reduction <add>, %163, %cst_60 [0] : vector<2x128xf32> to vector<128xf32>
    %248 = vector.shape_cast %247 : vector<128xf32> to vector<1x128xf32>
    %249 = arith.addf %246, %248 : vector<1x128xf32>
    %c0_61 = arith.constant 0 : index
    %c0_62 = arith.constant 0 : index
    %c0_63 = arith.constant 0 : index
    %250 = vector.load %arg7[%c0_61, %c0_62, %c0_63] : memref<1x16x128xf32, #tpu.memory_space<vmem>>, vector<1x1x128xf32>
    %251 = vector.shape_cast %250 : vector<1x1x128xf32> to vector<1x128xf32>
    %252 = vector.shape_cast %249 : vector<1x128xf32> to vector<1x1x128xf32>
    tpu.vector_store %arg7[%c0_61, %c0_62, %c0_63], %252 {strides = array<i32>} : memref<1x16x128xf32, #tpu.memory_space<vmem>>, vector<1x1x128xf32>,
    %c0_64 = arith.constant 0 : index
    %c1 = arith.constant 1 : index
    %c0_65 = arith.constant 0 : index
    %253 = vector.load %arg7[%c0_64, %c1, %c0_65] : memref<1x16x128xf32, #tpu.memory_space<vmem>>, vector<1x1x128xf32>
    %254 = vector.shape_cast %253 : vector<1x1x128xf32> to vector<1x128xf32>
    %cst_66 = arith.constant dense<0.000000e+00> : vector<128xf32>
    %255 = vector.multi_reduction <add>, %177, %cst_66 [0] : vector<2x128xf32> to vector<128xf32>
    %256 = vector.shape_cast %255 : vector<128xf32> to vector<1x128xf32>
    %257 = arith.addf %254, %256 : vector<1x128xf32>
    %c0_67 = arith.constant 0 : index
    %c1_68 = arith.constant 1 : index
    %c0_69 = arith.constant 0 : index
    %258 = vector.load %arg7[%c0_67, %c1_68, %c0_69] : memref<1x16x128xf32, #tpu.memory_space<vmem>>, vector<1x1x128xf32>
    %259 = vector.shape_cast %258 : vector<1x1x128xf32> to vector<1x128xf32>
    %260 = vector.shape_cast %257 : vector<1x128xf32> to vector<1x1x128xf32>
    tpu.vector_store %arg7[%c0_67, %c1_68, %c0_69], %260 {strides = array<i32>} : memref<1x16x128xf32, #tpu.memory_space<vmem>>, vector<1x1x128xf32>,
    %c0_70 = arith.constant 0 : index
    %c2 = arith.constant 2 : index
    %c0_71 = arith.constant 0 : index
    %261 = vector.load %arg7[%c0_70, %c2, %c0_71] : memref<1x16x128xf32, #tpu.memory_space<vmem>>, vector<1x1x128xf32>
    %262 = vector.shape_cast %261 : vector<1x1x128xf32> to vector<1x128xf32>
    %cst_72 = arith.constant dense<0.000000e+00> : vector<128xf32>
    %263 = vector.multi_reduction <add>, %183, %cst_72 [0] : vector<2x128xf32> to vector<128xf32>
    %264 = vector.shape_cast %263 : vector<128xf32> to vector<1x128xf32>
    %265 = arith.addf %262, %264 : vector<1x128xf32>
    %c0_73 = arith.constant 0 : index
    %c2_74 = arith.constant 2 : index
    %c0_75 = arith.constant 0 : index
    %266 = vector.load %arg7[%c0_73, %c2_74, %c0_75] : memref<1x16x128xf32, #tpu.memory_space<vmem>>, vector<1x1x128xf32>
    %267 = vector.shape_cast %266 : vector<1x1x128xf32> to vector<1x128xf32>
    %268 = vector.shape_cast %265 : vector<1x128xf32> to vector<1x1x128xf32>
    tpu.vector_store %arg7[%c0_73, %c2_74, %c0_75], %268 {strides = array<i32>} : memref<1x16x128xf32, #tpu.memory_space<vmem>>, vector<1x1x128xf32>,
    %c0_76 = arith.constant 0 : index
    %c3 = arith.constant 3 : index
    %c0_77 = arith.constant 0 : index
    %269 = vector.load %arg7[%c0_76, %c3, %c0_77] : memref<1x16x128xf32, #tpu.memory_space<vmem>>, vector<1x1x128xf32>
    %270 = vector.shape_cast %269 : vector<1x1x128xf32> to vector<1x128xf32>
    %cst_78 = arith.constant dense<0.000000e+00> : vector<128xf32>
    %271 = vector.multi_reduction <add>, %189, %cst_78 [0] : vector<2x128xf32> to vector<128xf32>
    %272 = vector.shape_cast %271 : vector<128xf32> to vector<1x128xf32>
    %273 = arith.addf %270, %272 : vector<1x128xf32>
    %c0_79 = arith.constant 0 : index
    %c3_80 = arith.constant 3 : index
    %c0_81 = arith.constant 0 : index
    %274 = vector.load %arg7[%c0_79, %c3_80, %c0_81] : memref<1x16x128xf32, #tpu.memory_space<vmem>>, vector<1x1x128xf32>
    %275 = vector.shape_cast %274 : vector<1x1x128xf32> to vector<1x128xf32>
    %276 = vector.shape_cast %273 : vector<1x128xf32> to vector<1x1x128xf32>
    tpu.vector_store %arg7[%c0_79, %c3_80, %c0_81], %276 {strides = array<i32>} : memref<1x16x128xf32, #tpu.memory_space<vmem>>, vector<1x1x128xf32>,
    %c0_82 = arith.constant 0 : index
    %c4 = arith.constant 4 : index
    %c0_83 = arith.constant 0 : index
    %277 = vector.load %arg7[%c0_82, %c4, %c0_83] : memref<1x16x128xf32, #tpu.memory_space<vmem>>, vector<1x1x128xf32>
    %278 = vector.shape_cast %277 : vector<1x1x128xf32> to vector<1x128xf32>
    %cst_84 = arith.constant dense<0.000000e+00> : vector<128xf32>
    %279 = vector.multi_reduction <add>, %203, %cst_84 [0] : vector<2x128xf32> to vector<128xf32>
    %280 = vector.shape_cast %279 : vector<128xf32> to vector<1x128xf32>
    %281 = arith.addf %278, %280 : vector<1x128xf32>
    %c0_85 = arith.constant 0 : index
    %c4_86 = arith.constant 4 : index
    %c0_87 = arith.constant 0 : index
    %282 = vector.load %arg7[%c0_85, %c4_86, %c0_87] : memref<1x16x128xf32, #tpu.memory_space<vmem>>, vector<1x1x128xf32>
    %283 = vector.shape_cast %282 : vector<1x1x128xf32> to vector<1x128xf32>
    %284 = vector.shape_cast %281 : vector<1x128xf32> to vector<1x1x128xf32>
    tpu.vector_store %arg7[%c0_85, %c4_86, %c0_87], %284 {strides = array<i32>} : memref<1x16x128xf32, #tpu.memory_space<vmem>>, vector<1x1x128xf32>,
    %c0_88 = arith.constant 0 : index
    %c5 = arith.constant 5 : index
    %c0_89 = arith.constant 0 : index
    %285 = vector.load %arg7[%c0_88, %c5, %c0_89] : memref<1x16x128xf32, #tpu.memory_space<vmem>>, vector<1x1x128xf32>
    %286 = vector.shape_cast %285 : vector<1x1x128xf32> to vector<1x128xf32>
    %cst_90 = arith.constant dense<0.000000e+00> : vector<128xf32>
    %287 = vector.multi_reduction <add>, %217, %cst_90 [0] : vector<2x128xf32> to vector<128xf32>
    %288 = vector.shape_cast %287 : vector<128xf32> to vector<1x128xf32>
    %289 = arith.addf %286, %288 : vector<1x128xf32>
    %c0_91 = arith.constant 0 : index
    %c5_92 = arith.constant 5 : index
    %c0_93 = arith.constant 0 : index
    %290 = vector.load %arg7[%c0_91, %c5_92, %c0_93] : memref<1x16x128xf32, #tpu.memory_space<vmem>>, vector<1x1x128xf32>
    %291 = vector.shape_cast %290 : vector<1x1x128xf32> to vector<1x128xf32>
    %292 = vector.shape_cast %289 : vector<1x128xf32> to vector<1x1x128xf32>
    tpu.vector_store %arg7[%c0_91, %c5_92, %c0_93], %292 {strides = array<i32>} : memref<1x16x128xf32, #tpu.memory_space<vmem>>, vector<1x1x128xf32>,
    %c0_94 = arith.constant 0 : index
    %c6 = arith.constant 6 : index
    %c0_95 = arith.constant 0 : index
    %293 = vector.load %arg7[%c0_94, %c6, %c0_95] : memref<1x16x128xf32, #tpu.memory_space<vmem>>, vector<1x1x128xf32>
    %294 = vector.shape_cast %293 : vector<1x1x128xf32> to vector<1x128xf32>
    %cst_96 = arith.constant dense<0.000000e+00> : vector<128xf32>
    %295 = vector.multi_reduction <add>, %222, %cst_96 [0] : vector<2x128xf32> to vector<128xf32>
    %296 = vector.shape_cast %295 : vector<128xf32> to vector<1x128xf32>
    %297 = arith.addf %294, %296 : vector<1x128xf32>
    %c0_97 = arith.constant 0 : index
    %c6_98 = arith.constant 6 : index
    %c0_99 = arith.constant 0 : index
    %298 = vector.load %arg7[%c0_97, %c6_98, %c0_99] : memref<1x16x128xf32, #tpu.memory_space<vmem>>, vector<1x1x128xf32>
    %299 = vector.shape_cast %298 : vector<1x1x128xf32> to vector<1x128xf32>
    %300 = vector.shape_cast %297 : vector<1x128xf32> to vector<1x1x128xf32>
    tpu.vector_store %arg7[%c0_97, %c6_98, %c0_99], %300 {strides = array<i32>} : memref<1x16x128xf32, #tpu.memory_space<vmem>>, vector<1x1x128xf32>,
    %c0_100 = arith.constant 0 : index
    %c7 = arith.constant 7 : index
    %c0_101 = arith.constant 0 : index
    %301 = vector.load %arg7[%c0_100, %c7, %c0_101] : memref<1x16x128xf32, #tpu.memory_space<vmem>>, vector<1x1x128xf32>
    %302 = vector.shape_cast %301 : vector<1x1x128xf32> to vector<1x128xf32>
    %cst_102 = arith.constant dense<0.000000e+00> : vector<128xf32>
    %303 = vector.multi_reduction <add>, %227, %cst_102 [0] : vector<2x128xf32> to vector<128xf32>
    %304 = vector.shape_cast %303 : vector<128xf32> to vector<1x128xf32>
    %305 = arith.addf %302, %304 : vector<1x128xf32>
    %c0_103 = arith.constant 0 : index
    %c7_104 = arith.constant 7 : index
    %c0_105 = arith.constant 0 : index
    %306 = vector.load %arg7[%c0_103, %c7_104, %c0_105] : memref<1x16x128xf32, #tpu.memory_space<vmem>>, vector<1x1x128xf32>
    %307 = vector.shape_cast %306 : vector<1x1x128xf32> to vector<1x128xf32>
    %308 = vector.shape_cast %305 : vector<1x128xf32> to vector<1x1x128xf32>
    tpu.vector_store %arg7[%c0_103, %c7_104, %c0_105], %308 {strides = array<i32>} : memref<1x16x128xf32, #tpu.memory_space<vmem>>, vector<1x1x128xf32>,
    %c0_106 = arith.constant 0 : index
    %c8 = arith.constant 8 : index
    %c0_107 = arith.constant 0 : index
    %309 = vector.load %arg7[%c0_106, %c8, %c0_107] : memref<1x16x128xf32, #tpu.memory_space<vmem>>, vector<1x1x128xf32>
    %310 = vector.shape_cast %309 : vector<1x1x128xf32> to vector<1x128xf32>
    %cst_108 = arith.constant dense<0.000000e+00> : vector<128xf32>
    %311 = vector.multi_reduction <add>, %232, %cst_108 [0] : vector<2x128xf32> to vector<128xf32>
    %312 = vector.shape_cast %311 : vector<128xf32> to vector<1x128xf32>
    %313 = arith.addf %310, %312 : vector<1x128xf32>
    %c0_109 = arith.constant 0 : index
    %c8_110 = arith.constant 8 : index
    %c0_111 = arith.constant 0 : index
    %314 = vector.load %arg7[%c0_109, %c8_110, %c0_111] : memref<1x16x128xf32, #tpu.memory_space<vmem>>, vector<1x1x128xf32>
    %315 = vector.shape_cast %314 : vector<1x1x128xf32> to vector<1x128xf32>
    %316 = vector.shape_cast %313 : vector<1x128xf32> to vector<1x1x128xf32>
    tpu.vector_store %arg7[%c0_109, %c8_110, %c0_111], %316 {strides = array<i32>} : memref<1x16x128xf32, #tpu.memory_space<vmem>>, vector<1x1x128xf32>,
    %c0_112 = arith.constant 0 : index
    %c9 = arith.constant 9 : index
    %c0_113 = arith.constant 0 : index
    %317 = vector.load %arg7[%c0_112, %c9, %c0_113] : memref<1x16x128xf32, #tpu.memory_space<vmem>>, vector<1x1x128xf32>
    %318 = vector.shape_cast %317 : vector<1x1x128xf32> to vector<1x128xf32>
    %cst_114 = arith.constant dense<0.000000e+00> : vector<128xf32>
    %319 = vector.multi_reduction <add>, %244, %cst_114 [0] : vector<2x128xf32> to vector<128xf32>
    %320 = vector.shape_cast %319 : vector<128xf32> to vector<1x128xf32>
    %321 = arith.addf %318, %320 : vector<1x128xf32>
    %c0_115 = arith.constant 0 : index
    %c9_116 = arith.constant 9 : index
    %c0_117 = arith.constant 0 : index
    %322 = vector.load %arg7[%c0_115, %c9_116, %c0_117] : memref<1x16x128xf32, #tpu.memory_space<vmem>>, vector<1x1x128xf32>
    %323 = vector.shape_cast %322 : vector<1x1x128xf32> to vector<1x128xf32>
    %324 = vector.shape_cast %321 : vector<1x128xf32> to vector<1x1x128xf32>
    tpu.vector_store %arg7[%c0_115, %c9_116, %c0_117], %324 {strides = array<i32>} : memref<1x16x128xf32, #tpu.memory_space<vmem>>, vector<1x1x128xf32>,
    %c0_118 = arith.constant 0 : index
    %c10 = arith.constant 10 : index
    %c0_119 = arith.constant 0 : index
    %325 = vector.load %arg7[%c0_118, %c10, %c0_119] : memref<1x16x128xf32, #tpu.memory_space<vmem>>, vector<1x1x128xf32>
    %326 = vector.shape_cast %325 : vector<1x1x128xf32> to vector<1x128xf32>
    %cst_120 = arith.constant dense<0.000000e+00> : vector<128xf32>
    %327 = vector.multi_reduction <add>, %31, %cst_120 [0] : vector<2x128xf32> to vector<128xf32>
    %328 = vector.shape_cast %327 : vector<128xf32> to vector<1x128xf32>
    %329 = arith.addf %326, %328 : vector<1x128xf32>
    %c0_121 = arith.constant 0 : index
    %c10_122 = arith.constant 10 : index
    %c0_123 = arith.constant 0 : index
    %330 = vector.load %arg7[%c0_121, %c10_122, %c0_123] : memref<1x16x128xf32, #tpu.memory_space<vmem>>, vector<1x1x128xf32>
    %331 = vector.shape_cast %330 : vector<1x1x128xf32> to vector<1x128xf32>
    %332 = vector.shape_cast %329 : vector<1x128xf32> to vector<1x1x128xf32>
    tpu.vector_store %arg7[%c0_121, %c10_122, %c0_123], %332 {strides = array<i32>} : memref<1x16x128xf32, #tpu.memory_space<vmem>>, vector<1x1x128xf32>,
    return
  }
  func.func @transform_0(%arg0: i32, %arg1: i32, %arg2: i32) -> (i32, i32, i32, i32, i32) {
    %c0_i32 = arith.constant 0 : i32
    %c0_i32_0 = arith.constant 0 : i32
    %c0_i32_1 = arith.constant 0 : i32
    return %arg0, %arg1, %c0_i32, %arg2, %c0_i32_0 : i32, i32, i32, i32, i32
  }
  func.func @transform_1(%arg0: i32, %arg1: i32, %arg2: i32) -> (i32, i32, i32, i32, i32) {
    %c0_i32 = arith.constant 0 : i32
    %c0_i32_0 = arith.constant 0 : i32
    %c0_i32_1 = arith.constant 0 : i32
    return %arg0, %arg1, %c0_i32, %arg2, %c0_i32_0 : i32, i32, i32, i32, i32
  }
  func.func @transform_2(%arg0: i32, %arg1: i32, %arg2: i32) -> (i32, i32, i32, i32) {
    %c0_i32 = arith.constant 0 : i32
    %c0_i32_0 = arith.constant 0 : i32
    %c0_i32_1 = arith.constant 0 : i32
    return %arg1, %c0_i32, %arg2, %c0_i32_0 : i32, i32, i32, i32
  }
  func.func @transform_3(%arg0: i32, %arg1: i32, %arg2: i32) -> (i32, i32, i32) {
    %c0_i32 = arith.constant 0 : i32
    %c0_i32_0 = arith.constant 0 : i32
    %c0_i32_1 = arith.constant 0 : i32
    return %arg0, %c0_i32, %c0_i32_0 : i32, i32, i32
  }
  func.func @transform_4(%arg0: i32, %arg1: i32, %arg2: i32) -> (i32, i32, i32) {
    %c0_i32 = arith.constant 0 : i32
    %c0_i32_0 = arith.constant 0 : i32
    %c0_i32_1 = arith.constant 0 : i32
    return %arg0, %c0_i32, %c0_i32_0 : i32, i32, i32
  }
}

</mosaic_0001>

<llo_original>
// kernel: tpu_custom_call.1
$region0: #{tpu_custom_call.1}
  #allocation0 [shape = 'u32[]', space=smem, size = 0x4, offset = 0x4, fixed_abs, tag = 'smem constant byte address 0x4 - core index']
  #allocation1 [shape = 'u32[144,128]{1,0:T(1,128)}', space=vmem, size = 0x12000, scoped, tag = 'internal scratch']
  %s0 = inlined_call_operand.hbm [shape: f32[2,3,15,2,128], index: 0, kind: input, shape index: {}]
  %s1 = inlined_call_operand.hbm [shape: f32[2,3,18,2,128], index: 1, kind: input, shape index: {}]
  %s2 = inlined_call_operand.vmem [shape: f32[3,4,2,128], index: 2, kind: input, shape index: {}]
  %s3 = inlined_call_operand.vmem [shape: f32[2,8,4], index: 3, kind: input, shape index: {}]
  %s4 = inlined_call_operand.hbm [shape: f32[2,16,128], index: 4, kind: output, shape index: {}]
  %s5 = sld [smem:[#allocation0]]
  $region61: #{tpu_custom_call.1} parent=0
    _
  %s7 = ssub.s32 1, %s5
  %s8 = scalar_select 0, %s7, %s5
  $region1: #{tpu_custom_call.1} parent=0
    #allocation2 [shape = 'u8[30720]{0}', space=vmem, size = 0x7800, scoped, tag = 'input window, operand 0']
    #allocation3 [shape = 's32[2]{0}', space=sflag, size = 0x8, scoped, tag = 'scoped memory for tpu_custom_call.1']
    #allocation4 [shape = 's32[2]{0}', space=sflag, size = 0x8, scoped, tag = 'scoped memory for tpu_custom_call.1']
    #allocation5 [shape = 'u8[36864]{0}', space=vmem, size = 0x9000, scoped, tag = 'input window, operand 1']
    #allocation6 [shape = 's32[2]{0}', space=sflag, size = 0x8, scoped, tag = 'scoped memory for tpu_custom_call.1']
    #allocation7 [shape = 'u8[16384]{0}', space=vmem, size = 0x4000, scoped, tag = 'output window, operand 0']
    %9 = vsyncpa [#allocation3], 0
    %s10 = scalar_lea.sflag [#allocation3], 1
    %11 = vsyncpa %s10, 0
    %12 = vsyncpa [#allocation6], 0
    %s13 = scalar_lea.sflag [#allocation6], 1
    %14 = vsyncpa %s13, 0
    %15 = vsyncpa [#allocation4], 0
    %s16 = scalar_lea.sflag [#allocation4], 1
    %17 = vsyncpa %s16, 0
    loop: start=0, step=1, limit=8
    $region2: #{tpu_custom_call.1} parent=1 // loop_pre_header
      _
    $region3: #{tpu_custom_call.1} parent=1 // loop_header
      %s19 = sphi 0, %s23
      %p20 = scmp.ge.s32.totalorder %s19, 8
      %s26 = sphi 0, %s45
      %s27 = sphi 0, %s41
      %s28 = sphi 0, %s37
      %s29 = sphi 0, %s26
      %s30 = sphi 0, %s27
      %s31 = sphi 0, %s28
      %s32 = sphi 0, %s29
      %s33 = sphi 0, %s30
      %s34 = sphi 0, %s31
      %s52 = sphi 0, %s54
      %s55 = sphi 0, %s52
      %s56 = sphi 0, %s55
      %s72 = sphi 0, %s56
      %s82 = sphi 0, %s84
      %s85 = sphi 0, %s82
      %s86 = sphi 0, %s85
      %s102 = sphi 0, %s86
      %s110 = sphi 0, %s112
      %s113 = sphi 0, %s110
      %s114 = sphi 0, %s113
      %s130 = sphi 0, %s114
      %s136 = sphi 0, %s138
      %s139 = sphi 0, %s136
      %s140 = sphi 0, %s139
      %s156 = sphi 0, %s140
      %s162 = sphi 0, %s164
      %s165 = sphi 0, %s162
      %s166 = sphi 0, %s165
      %s182 = sphi 0, %s166
    $region4: #{tpu_custom_call.1} parent=1 // loop_header_branch
      %22 = sbr.rel (%p20) target = $region8
    $region5: #{tpu_custom_call.1} parent=1 // loop_body
      %s24 = ssub.s32 %s19, 1
      %s25 = ssub.s32 %s19, 2
      %s35 = sadd.s32 1, %s28
      %p36 = scmp.ge.s32.totalorder %s35, 1
      %s37 = scalar_select %p36, 0, %s35
      %s38 = sadd.s32 1, %s27
      %s39 = scalar_select %p36, %s38, %s27
      %p40 = scmp.ge.s32.totalorder %s39, 3
      %s41 = scalar_select %p40, 0, %s39
      %s42 = sadd.s32 1, %s26
      %s43 = scalar_select %p40, %s42, %s26
      %p44 = scmp.ge.s32.totalorder %s43, 2
      %s45 = scalar_select %p44, 0, %s43
      %s46 = ssub.s32 %s26, %s45
      %s47 = ssub.s32 %s27, %s41
      %s48 = sor.u32 %s46, %s47
      %s49 = ssub.s32 %s28, %s37
      %s50 = sor.u32 %s48, %s49
      %p51 = scmp.eq.s32.totalorder %s50, 0
      %s53 = sadd.s32 %s52, 1
      %s54 = scalar_select %p51, %s52, %s53
      %p57 = pneg %p51
      %p58 = scmp.eq.s32.totalorder %s19, 5
      %p59 = por %p57, %p58
      %p60 = scmp.ne.s32.totalorder %s52, %s55
      %p61 = scmp.eq.s32.totalorder %s19, 0
      %p62 = por %p60, %p61
      %p63 = scmp.ne.s32.totalorder %s52, %s55
      %p64 = scmp.eq.s32.totalorder %s24, 5
      %p65 = por %p63, %p64
      %p66 = scmp.ne.s32.totalorder %s55, %s56
      %p67 = scmp.eq.s32.totalorder %s24, 0
      %p68 = por %p66, %p67
      %p69 = scmp.ne.s32.totalorder %s55, %s56
      %p70 = scmp.eq.s32.totalorder %s25, 5
      %p71 = por %p69, %p70
      %p73 = scmp.ne.s32.totalorder %s56, %s72
      %p74 = scmp.eq.s32.totalorder %s25, 0
      %p75 = por %p73, %p74
      %s76 = ssub.s32 %s26, %s45
      %s77 = ssub.s32 %s27, %s41
      %s78 = sor.u32 %s76, %s77
      %s79 = ssub.s32 %s28, %s37
      %s80 = sor.u32 %s78, %s79
      %p81 = scmp.eq.s32.totalorder %s80, 0
      %s83 = sadd.s32 %s82, 1
      %s84 = scalar_select %p81, %s82, %s83
      %p87 = pneg %p81
      %p88 = scmp.eq.s32.totalorder %s19, 5
      %p89 = por %p87, %p88
      %p90 = scmp.ne.s32.totalorder %s82, %s85
      %p91 = scmp.eq.s32.totalorder %s19, 0
      %p92 = por %p90, %p91
      %p93 = scmp.ne.s32.totalorder %s82, %s85
      %p94 = scmp.eq.s32.totalorder %s24, 5
      %p95 = por %p93, %p94
      %p96 = scmp.ne.s32.totalorder %s85, %s86
      %p97 = scmp.eq.s32.totalorder %s24, 0
      %p98 = por %p96, %p97
      %p99 = scmp.ne.s32.totalorder %s85, %s86
      %p100 = scmp.eq.s32.totalorder %s25, 5
      %p101 = por %p99, %p100
      %p103 = scmp.ne.s32.totalorder %s86, %s102
      %p104 = scmp.eq.s32.totalorder %s25, 0
      %p105 = por %p103, %p104
      %s106 = ssub.s32 %s27, %s41
      %s107 = ssub.s32 %s28, %s37
      %s108 = sor.u32 %s106, %s107
      %p109 = scmp.eq.s32.totalorder %s108, 0
      %s111 = sadd.s32 %s110, 1
      %s112 = scalar_select %p109, %s110, %s111
      %p115 = pneg %p109
      %p116 = scmp.eq.s32.totalorder %s19, 5
      %p117 = por %p115, %p116
      %p118 = scmp.ne.s32.totalorder %s110, %s113
      %p119 = scmp.eq.s32.totalorder %s19, 0
      %p120 = por %p118, %p119
      %p121 = scmp.ne.s32.totalorder %s110, %s113
      %p122 = scmp.eq.s32.totalorder %s24, 5
      %p123 = por %p121, %p122
      %p124 = scmp.ne.s32.totalorder %s113, %s114
      %p125 = scmp.eq.s32.totalorder %s24, 0
      %p126 = por %p124, %p125
      %p127 = scmp.ne.s32.totalorder %s113, %s114
      %p128 = scmp.eq.s32.totalorder %s25, 5
      %p129 = por %p127, %p128
      %p131 = scmp.ne.s32.totalorder %s114, %s130
      %p132 = scmp.eq.s32.totalorder %s25, 0
      %p133 = por %p131, %p132
      %s134 = ssub.s32 %s26, %s45
      %p135 = scmp.eq.s32.totalorder %s134, 0
      %s137 = sadd.s32 %s136, 1
      %s138 = scalar_select %p135, %s136, %s137
      %p141 = pneg %p135
      %p142 = scmp.eq.s32.totalorder %s19, 5
      %p143 = por %p141, %p142
      %p144 = scmp.ne.s32.totalorder %s136, %s139
      %p145 = scmp.eq.s32.totalorder %s19, 0
      %p146 = por %p144, %p145
      %p147 = scmp.ne.s32.totalorder %s136, %s139
      %p148 = scmp.eq.s32.totalorder %s24, 5
      %p149 = por %p147, %p148
      %p150 = scmp.ne.s32.totalorder %s139, %s140
      %p151 = scmp.eq.s32.totalorder %s24, 0
      %p152 = por %p150, %p151
      %p153 = scmp.ne.s32.totalorder %s139, %s140
      %p154 = scmp.eq.s32.totalorder %s25, 5
      %p155 = por %p153, %p154
      %p157 = scmp.ne.s32.totalorder %s140, %s156
      %p158 = scmp.eq.s32.totalorder %s25, 0
      %p159 = por %p157, %p158
      %s160 = ssub.s32 %s26, %s45
      %p161 = scmp.eq.s32.totalorder %s160, 0
      %s163 = sadd.s32 %s162, 1
      %s164 = scalar_select %p161, %s162, %s163
      %p167 = pneg %p161
      %p168 = scmp.eq.s32.totalorder %s19, 5
      %p169 = por %p167, %p168
      %p170 = scmp.ne.s32.totalorder %s162, %s165
      %p171 = scmp.eq.s32.totalorder %s19, 0
      %p172 = por %p170, %p171
      %p173 = scmp.ne.s32.totalorder %s162, %s165
      %p174 = scmp.eq.s32.totalorder %s24, 5
      %p175 = por %p173, %p174
      %p176 = scmp.ne.s32.totalorder %s165, %s166
      %p177 = scmp.eq.s32.totalorder %s24, 0
      %p178 = por %p176, %p177
      %p179 = scmp.ne.s32.totalorder %s165, %s166
      %p180 = scmp.eq.s32.totalorder %s25, 5
      %p181 = por %p179, %p180
      %p183 = scmp.ne.s32.totalorder %s166, %s182
      %p184 = scmp.eq.s32.totalorder %s25, 0
      %p185 = por %p183, %p184
      %p186 = scmp.le.s32.totalorder 1, %s19
      %p187 = scmp.lt.s32.totalorder %s19, 7
      %p188 = pnand %p186, %p187
      %p189 = pneg %p188
      // Predicated region
      $region9: #{tpu_custom_call.1} parent=5 // pred_check
        _
      $region10: #{tpu_custom_call.1} parent=5 // pred_check_branch
        %191 = sbr.rel (%p188) target = $region12
      $region11: #{tpu_custom_call.1} parent=5 // pred_region
        %s192 = ssub.s32 %s19, 1
      $region12: #{tpu_custom_call.1} parent=5 // pred_fallthru
        _
      %p193 = scmp.lt.s32.totalorder %s19, 6
      // Predicated region
      $region13: #{tpu_custom_call.1} parent=5 // pred_check
        %p194 = pneg %p193
      $region14: #{tpu_custom_call.1} parent=5 // pred_check_branch
        %196 = sbr.rel (%p194) target = $region16
      $region15: #{tpu_custom_call.1} parent=5 // pred_region
        // Predicated region
        $region17: #{tpu_custom_call.1} parent=15 // pred_check
          %p197 = pneg %p62
        $region18: #{tpu_custom_call.1} parent=15 // pred_check_branch
          %199 = sbr.rel (%p197) target = $region20
        $region19: #{tpu_custom_call.1} parent=15 // pred_region
          %s200 = sand.u32 %s52, 1
          %s201 = scalar_lea.sflag [#allocation3], %s200
          %s202 = sand.u32 %s52, 1
          %s203 = smul.addr %s202, 30
          %s204 = scalar_lea.vmem [#allocation2], %s203
          %s206 = ssub.s32 480, 480
          %207 = vsyncadd %s201, %s206
          %s208 = smul.addr %s27, 15
          %s209 = sadd.s32 %s28, %s208
          %s210 = smul.addr %s26, 45
          %s211 = sadd.s32 %s209, %s210
          %s212 = smul.addr %s211, 32
          %s213 = scalar_lea.hbm %s0, %s212
          %s214 = sshll.u32 %s204, 4
          %s215 = int_to_ptr.vmem [resolvable:$true] %s214
          %220 = dma.hbm_to_vmem [thread:$0]  %s213, 480, %s215, %s201, 32, 32, 2
        $region20: #{tpu_custom_call.1} parent=15 // pred_fallthru
          _
        // Predicated region
        $region21: #{tpu_custom_call.1} parent=15 // pred_check
          %p221 = pneg %p92
        $region22: #{tpu_custom_call.1} parent=15 // pred_check_branch
          %223 = sbr.rel (%p221) target = $region24
        $region23: #{tpu_custom_call.1} parent=15 // pred_region
          %s224 = sand.u32 %s82, 1
          %s225 = scalar_lea.sflag [#allocation6], %s224
          %s226 = sand.u32 %s82, 1
          %s227 = smul.addr %s226, 36
          %s228 = scalar_lea.vmem [#allocation5], %s227
          %s230 = ssub.s32 576, 576
          %231 = vsyncadd %s225, %s230
          %s232 = smul.addr %s27, 18
          %s233 = sadd.s32 %s28, %s232
          %s234 = smul.addr %s26, 54
          %s235 = sadd.s32 %s233, %s234
          %s236 = smul.addr %s235, 32
          %s237 = scalar_lea.hbm %s1, %s236
          %s238 = sshll.u32 %s228, 4
          %s239 = int_to_ptr.vmem [resolvable:$true] %s238
          %244 = dma.hbm_to_vmem [thread:$0]  %s237, 576, %s239, %s225, 32, 32, 2
        $region24: #{tpu_custom_call.1} parent=15 // pred_fallthru
          _
        // Predicated region
        $region25: #{tpu_custom_call.1} parent=15 // pred_check
          %p245 = pneg %p120
        $region26: #{tpu_custom_call.1} parent=15 // pred_check_branch
          %247 = sbr.rel (%p245) target = $region28
        $region27: #{tpu_custom_call.1} parent=15 // pred_region
          %p248 = scmp.lt.s32.totalorder %s27, 2
          %s249 = scalar_select %p248, %s27, 2
          %p250 = scmp.lt.s32.totalorder %s28, 0
          %s251 = scalar_select %p250, %s28, 0
          %s252 = smul.addr %s249, 4
          %s253 = sadd.s32 %s251, %s252
          %s254 = smul.addr %s253, 2
          %s255 = scalar_lea.vmem %s2, %s254
        $region28: #{tpu_custom_call.1} parent=15 // pred_fallthru
          _
        // Predicated region
        $region29: #{tpu_custom_call.1} parent=15 // pred_check
          %p256 = pneg %p146
        $region30: #{tpu_custom_call.1} parent=15 // pred_check_branch
          %258 = sbr.rel (%p256) target = $region32
        $region31: #{tpu_custom_call.1} parent=15 // pred_region
          %p259 = scmp.lt.s32.totalorder %s26, 1
          %s260 = scalar_select %p259, %s26, 1
          %s261 = smul.addr %s260, 8
          %s262 = scalar_lea.vmem %s3, %s261
        $region32: #{tpu_custom_call.1} parent=15 // pred_fallthru
          _
      $region16: #{tpu_custom_call.1} parent=5 // pred_fallthru
        _
      %p263 = scmp.le.s32.totalorder 1, %s19
      %p264 = scmp.lt.s32.totalorder %s19, 7
      %p265 = pnand %p263, %p264
      %p266 = pneg %p265
      // Predicated region
      $region33: #{tpu_custom_call.1} parent=5 // pred_check
        _
      $region34: #{tpu_custom_call.1} parent=5 // pred_check_branch
        %268 = sbr.rel (%p265) target = $region36
      $region35: #{tpu_custom_call.1} parent=5 // pred_region
        %s269 = ssub.s32 %s19, 1
        %s270 = sand.u32 %s55, 1
        %s271 = scalar_lea.sflag [#allocation3], %s270
        %s272 = sand.u32 %s55, 1
        %s273 = smul.addr %s272, 30
        %s274 = scalar_lea.vmem [#allocation2], %s273
        // Predicated region
        $region37: #{tpu_custom_call.1} parent=35 // pred_check
          %p275 = pneg %p68
        $region38: #{tpu_custom_call.1} parent=35 // pred_check_branch
          %277 = sbr.rel (%p275) target = $region40
        $region39: #{tpu_custom_call.1} parent=35 // pred_region
          %278 = dma.done %s271, 480
        $region40: #{tpu_custom_call.1} parent=35 // pred_fallthru
          _
        %s279 = sand.u32 %s85, 1
        %s280 = scalar_lea.sflag [#allocation6], %s279
        %s281 = sand.u32 %s85, 1
        %s282 = smul.addr %s281, 36
        %s283 = scalar_lea.vmem [#allocation5], %s282
        // Predicated region
        $region41: #{tpu_custom_call.1} parent=35 // pred_check
          %p284 = pneg %p98
        $region42: #{tpu_custom_call.1} parent=35 // pred_check_branch
          %286 = sbr.rel (%p284) target = $region44
        $region43: #{tpu_custom_call.1} parent=35 // pred_region
          %287 = dma.done %s280, 576
        $region44: #{tpu_custom_call.1} parent=35 // pred_fallthru
          _
        %s288 = sand.u32 %s55, 1
        %s289 = scalar_lea.sflag [#allocation3], %s288
        %s290 = sand.u32 %s55, 1
        %s291 = smul.addr %s290, 30
        %s292 = scalar_lea.vmem [#allocation2], %s291
        %p293 = pneg %p68
        %p294 = pneg %p65
        %s295 = sand.u32 %s85, 1
        %s296 = scalar_lea.sflag [#allocation6], %s295
        %s297 = sand.u32 %s85, 1
        %s298 = smul.addr %s297, 36
        %s299 = scalar_lea.vmem [#allocation5], %s298
        %p300 = pneg %p98
        %p301 = pneg %p95
        %p302 = scmp.lt.s32.totalorder %s30, 2
        %s303 = scalar_select %p302, %s30, 2
        %p304 = scmp.lt.s32.totalorder %s31, 0
        %s305 = scalar_select %p304, %s31, 0
        %s306 = smul.addr %s303, 4
        %s307 = sadd.s32 %s305, %s306
        %s308 = smul.addr %s307, 2
        %s309 = scalar_lea.vmem %s2, %s308
        %p310 = pneg %p126
        %p311 = pneg %p123
        %p312 = scmp.lt.s32.totalorder %s29, 1
        %s313 = scalar_select %p312, %s29, 1
        %s314 = smul.addr %s313, 8
        %s315 = scalar_lea.vmem %s3, %s314
        %p316 = pneg %p152
        %p317 = pneg %p149
        %p318 = pneg %p178
        %p319 = pneg %p175
        %s320 = sand.u32 %s165, 1
        %s321 = scalar_lea.sflag [#allocation4], %s320
        %s322 = sand.u32 %s165, 1
        %s323 = smul.addr %s322, 16
        %s324 = scalar_lea.vmem [#allocation7], %s323
        %p325 = scmp.lt.s32.totalorder %s30, 2
        %s326 = scalar_select %p325, %s30, 2
        %p327 = scmp.lt.s32.totalorder %s31, 0
        %s328 = scalar_select %p327, %s31, 0
        %s329 = smul.addr %s326, 4
        %s330 = sadd.s32 %s328, %s329
        %s331 = smul.addr %s330, 2
        %s332 = scalar_lea.vmem %s2, %s331
        %p333 = scmp.lt.s32.totalorder %s29, 1
        %s334 = scalar_select %p333, %s29, 1
        %s335 = smul.addr %s334, 8
        %s336 = scalar_lea.vmem %s3, %s335
        %p337 = scmp.eq.s32.totalorder %s30, 0
        %p338 = scmp.eq.s32.totalorder %s31, 0
        %p339 = pnand %p337, %p338
        %p340 = pneg %p339
        // Predicated region
        $region45: #{tpu_custom_call.1} parent=35 // pred_check
          _
        $region46: #{tpu_custom_call.1} parent=35 // pred_check_branch
          %342 = sbr.rel (%p339) target = $region48
        $region47: #{tpu_custom_call.1} parent=35 // pred_region
          %343 = vst [vmem:[%s324] sm:$0xff] 0.0
          %344 = vst [vmem:[%s324 + $0x8] sm:$0xff] 0.0
        $region48: #{tpu_custom_call.1} parent=35 // pred_fallthru
          _
        %v345 = vld [vmem:[%s274] sm:$0x3]
        %v346 = vld [vmem:[%s274 + $0x2] sm:$0x3]
        %v347 = vld [vmem:[%s274 + $0x4] sm:$0x3]
        %v348 = vld [vmem:[%s274 + $0x6] sm:$0x3]
        %v349 = vld [vmem:[%s274 + $0x8] sm:$0x3]
        %v350 = vld [vmem:[%s274 + $0xa] sm:$0x3]
        %v351 = vld [vmem:[%s274 + $0xc] sm:$0x3]
        %v352 = vld [vmem:[%s274 + $0xe] sm:$0x3]
        %v353 = vld [vmem:[%s274 + $0x10] sm:$0x3]
        %v354 = vld [vmem:[%s274 + $0x12] sm:$0x3]
        %v355 = vld [vmem:[%s274 + $0x14] sm:$0x3]
        %v356 = vld [vmem:[%s274 + $0x16] sm:$0x3]
        %v357 = vld [vmem:[%s274 + $0x18] sm:$0x3]
        %v358 = vld [vmem:[%s274 + $0x1a] sm:$0x3]
        %v359 = vld [vmem:[%s274 + $0x1c] sm:$0x3]
        %v360 = vld [vmem:[%s283] sm:$0x3]
        %v361 = vld [vmem:[%s283 + $0x2] sm:$0x3]
        %v362 = vld [vmem:[%s283 + $0x4] sm:$0x3]
        %v363 = vld [vmem:[%s283 + $0x6] sm:$0x3]
        %v364 = vld [vmem:[%s283 + $0x8] sm:$0x3]
        %v365 = vld [vmem:[%s283 + $0xa] sm:$0x3]
        %v366 = vld [vmem:[%s283 + $0xc] sm:$0x3]
        %v367 = vld [vmem:[%s283 + $0xe] sm:$0x3]
        %v368 = vld [vmem:[%s283 + $0x10] sm:$0x3]
        %v369 = vld [vmem:[%s283 + $0x12] sm:$0x3]
        %v370 = vld [vmem:[%s283 + $0x14] sm:$0x3]
        %v371 = vld [vmem:[%s283 + $0x16] sm:$0x3]
        %v372 = vld [vmem:[%s283 + $0x18] sm:$0x3]
        %v373 = vld [vmem:[%s283 + $0x1a] sm:$0x3]
        %v374 = vld [vmem:[%s283 + $0x1c] sm:$0x3]
        %v375 = vld [vmem:[%s283 + $0x1e] sm:$0x3]
        %v376 = vld [vmem:[%s283 + $0x20] sm:$0x3]
        %v377 = vld [vmem:[%s283 + $0x22] sm:$0x3]
        %v378 = vld [vmem:[%s332] sm:$0x3]
        %v379 = vld [vmem:[%s332 + $0x2] sm:$0x3]
        %v380 = vld [vmem:[%s332 + $0x4] sm:$0x3]
        %v381 = vld [vmem:[%s332 + $0x6] sm:$0x3]
        %v382 = vld [vmem:[%s336] sm:$0xff]
        %v383 = vtanh.pop %v351
        %v384 = vtanh.pop %v352
        %v385 = vtanh.pop %v353
        %v386 = vtanh.pop %v354
        %v387 = vtanh.pop %v355
        %v388 = vtanh.pop %v356
        %v389 = vtanh.pop %v357
        %v390 = vtanh.pop %v358
        %v391 = vtanh.pop %v359
        %v392 = vxor.u32 %v345, 2147483648
        %v393 = vmul.f32 %v392, 1.442695
        %v394 = vpow.pop %v393
        %v395 = vadd.f32 %v394, 1.0
        %v396 = vrcp.pop %v395
        %v397 = vmul.f32 1.0, %v396
        %v398 = vxor.u32 %v346, 2147483648
        %v399 = vmul.f32 %v398, 1.442695
        %v400 = vpow.pop %v399
        %v401 = vadd.f32 %v400, 1.0
        %v402 = vrcp.pop %v401
        %v403 = vmul.f32 1.0, %v402
        %v404 = vadd.f32 %v397, %v378
        %v405 = vadd.f32 %v403, %v379
        %v406 = vmul.f32 %v347, 1.442695
        %v407 = vpow.pop %v406
        %v408 = vmul.f32 %v407, %v380
        %v409 = vmul.f32 %v348, 1.442695
        %v410 = vpow.pop %v409
        %v411 = vmul.f32 %v410, %v381
        %v412 = vmul.f32 %v408, 0.5
        %v413 = vsub.f32 %v404, %v412
        %v414 = vadd.f32 %v404, %v412
        %v415 = vmul.f32 %v411, 0.5
        %v416 = vsub.f32 %v405, %v415
        %v417 = vadd.f32 %v405, %v415
        %v418 = vmul.f32 %v408, %v411
        %v420 = vcombine.high %v382, %v382
        %v422 = vunpack.c.l.s4 1966171168
        %v423 = vunpack.c.0.s8 %v422
        %v424 = vlaneseq
        %v425 = vshrl.u32 %v424, 7
        %v426 = vsub.s32 %v423, %v425
        %v427 = vrot.slane %v382, %v426
        %v429 = vunpack.c.l.s4 1966171168
        %v430 = vunpack.c.0.s8 %v429
        %v431 = vlaneseq
        %v432 = vshrl.u32 %v431, 7
        %v433 = vsub.s32 %v430, %v432
        %v434 = vrot.slane %v420, %v433
        %v435 = vcombine.high %v427, %v427
        %v436 = vcombine.high %v434, %v434
        %v438 = vunpack.c.l.s4 1966171168
        %v439 = vunpack.c.0.s8 %v438
        %v440 = vlaneseq
        %v441 = vshrl.u32 %v440, 7
        %v442 = vsub.s32 %v439, %v441
        %v443 = vrot.slane %v427, %v442
        %v445 = vunpack.c.l.s4 1966171168
        %v446 = vunpack.c.0.s8 %v445
        %v447 = vlaneseq
        %v448 = vshrl.u32 %v447, 7
        %v449 = vsub.s32 %v446, %v448
        %v450 = vrot.slane %v434, %v449
        %v452 = vunpack.c.l.s4 1966171168
        %v453 = vunpack.c.0.s8 %v452
        %v454 = vlaneseq
        %v455 = vshrl.u32 %v454, 7
        %v456 = vsub.s32 %v453, %v455
        %v457 = vrot.slane %v435, %v456
        %v459 = vunpack.c.l.s4 1966171168
        %v460 = vunpack.c.0.s8 %v459
        %v461 = vlaneseq
        %v462 = vshrl.u32 %v461, 7
        %v463 = vsub.s32 %v460, %v462
        %v464 = vrot.slane %v436, %v463
        %v465 = vcombine.high %v443, %v443
        %v466 = vcombine.high %v450, %v450
        %v467 = vcombine.high %v457, %v457
        %v468 = vcombine.high %v464, %v464
        %v477 = vmul.f32 %v443, 0.5
        %v478 = vmul.f32 %v457, 0.5
        %v479 = vmul.f32 %v465, 0.5
        %v480 = vmul.f32 %v467, 0.5
        %v481 = vmul.f32 %v450, 0.5
        %v482 = vmul.f32 %v464, 0.5
        %v483 = vmul.f32 %v466, 0.5
        %v484 = vmul.f32 %v468, 0.5
        %493 = vrot.lane.b32.xlu0 %v477, 126
        %v494 = vpop.permute.xlu0 %493
        %495 = vrot.lane.b32.xlu0 %v478, 126
        %v496 = vpop.permute.xlu0 %495
        %497 = vrot.lane.b32.xlu0 %v479, 126
        %v498 = vpop.permute.xlu0 %497
        %499 = vrot.lane.b32.xlu0 %v480, 126
        %v500 = vpop.permute.xlu0 %499
        %501 = vrot.lane.b32.xlu0 %v481, 126
        %v502 = vpop.permute.xlu0 %501
        %503 = vrot.lane.b32.xlu0 %v482, 126
        %v504 = vpop.permute.xlu0 %503
        %505 = vrot.lane.b32.xlu0 %v483, 126
        %v506 = vpop.permute.xlu0 %505
        %507 = vrot.lane.b32.xlu0 %v484, 126
        %v508 = vpop.permute.xlu0 %507
        %v517 = vsub.f32 %v443, %v494
        %v518 = vsub.f32 %v457, %v496
        %v519 = vsub.f32 %v465, %v498
        %v520 = vsub.f32 %v467, %v500
        %v521 = vsub.f32 %v450, %v502
        %v522 = vsub.f32 %v464, %v504
        %v523 = vsub.f32 %v466, %v506
        %v524 = vsub.f32 %v468, %v508
        %v525 = vadd.f32 %v443, %v494
        %v526 = vadd.f32 %v457, %v496
        %v527 = vadd.f32 %v465, %v498
        %v528 = vadd.f32 %v467, %v500
        %v529 = vadd.f32 %v450, %v502
        %v530 = vadd.f32 %v464, %v504
        %v531 = vadd.f32 %v466, %v506
        %v532 = vadd.f32 %v468, %v508
        %533 = vrot.lane.b32.xlu0 %v443, 127
        %v534 = vpop.permute.xlu0 %533
        %535 = vrot.lane.b32.xlu0 %v457, 127
        %v536 = vpop.permute.xlu0 %535
        %537 = vrot.lane.b32.xlu0 %v465, 127
        %v538 = vpop.permute.xlu0 %537
        %539 = vrot.lane.b32.xlu0 %v467, 127
        %v540 = vpop.permute.xlu0 %539
        %541 = vrot.lane.b32.xlu0 %v450, 127
        %v542 = vpop.permute.xlu0 %541
        %543 = vrot.lane.b32.xlu0 %v464, 127
        %v544 = vpop.permute.xlu0 %543
        %545 = vrot.lane.b32.xlu0 %v466, 127
        %v546 = vpop.permute.xlu0 %545
        %547 = vrot.lane.b32.xlu0 %v468, 127
        %v548 = vpop.permute.xlu0 %547
        %v557 = vmul.f32 %v443, %v534
        %v558 = vmul.f32 %v457, %v536
        %v559 = vmul.f32 %v465, %v538
        %v560 = vmul.f32 %v467, %v540
        %v561 = vmul.f32 %v450, %v542
        %v562 = vmul.f32 %v464, %v544
        %v563 = vmul.f32 %v466, %v546
        %v564 = vmul.f32 %v468, %v548
        %v573 = vlaneseq
        %v574 = vshrl.u32 %v573, 7
        %v575 = vsub.s32 0, %v574
        %v576 = vrot.slane %v525, %v575
        %v577 = vlaneseq
        %v578 = vshrl.u32 %v577, 7
        %v579 = vsub.s32 0, %v578
        %v580 = vrot.slane %v526, %v579
        %v581 = vlaneseq
        %v582 = vshrl.u32 %v581, 7
        %v583 = vsub.s32 0, %v582
        %v584 = vrot.slane %v527, %v583
        %v585 = vlaneseq
        %v586 = vshrl.u32 %v585, 7
        %v587 = vsub.s32 0, %v586
        %v588 = vrot.slane %v528, %v587
        %v589 = vlaneseq
        %v590 = vshrl.u32 %v589, 7
        %v591 = vsub.s32 0, %v590
        %v592 = vrot.slane %v529, %v591
        %v593 = vlaneseq
        %v594 = vshrl.u32 %v593, 7
        %v595 = vsub.s32 0, %v594
        %v596 = vrot.slane %v530, %v595
        %v597 = vlaneseq
        %v598 = vshrl.u32 %v597, 7
        %v599 = vsub.s32 0, %v598
        %v600 = vrot.slane %v531, %v599
        %v601 = vlaneseq
        %v602 = vshrl.u32 %v601, 7
        %v603 = vsub.s32 0, %v602
        %v604 = vrot.slane %v532, %v603
        %605 = vset.pattern.permute.xlu0 0
        %606 = vperm.xlu0 %605, %v576
        %v607 = vpop.permute.xlu0 %606
        %609 = vset.pattern.permute.xlu0 0
        %610 = vperm.xlu0 %609, %v580
        %v611 = vpop.permute.xlu0 %610
        %613 = vset.pattern.permute.xlu0 0
        %614 = vperm.xlu0 %613, %v584
        %v615 = vpop.permute.xlu0 %614
        %617 = vset.pattern.permute.xlu0 0
        %618 = vperm.xlu0 %617, %v588
        %v619 = vpop.permute.xlu0 %618
        %621 = vset.pattern.permute.xlu0 0
        %622 = vperm.xlu0 %621, %v592
        %v623 = vpop.permute.xlu0 %622
        %625 = vset.pattern.permute.xlu0 0
        %626 = vperm.xlu0 %625, %v596
        %v627 = vpop.permute.xlu0 %626
        %629 = vset.pattern.permute.xlu0 0
        %630 = vperm.xlu0 %629, %v600
        %v631 = vpop.permute.xlu0 %630
        %633 = vset.pattern.permute.xlu0 0
        %634 = vperm.xlu0 %633, %v604
        %v635 = vpop.permute.xlu0 %634
        %v637 = vmin.f32 %v414, %v607
        %v638 = vmin.f32 %v414, %v611
        %v639 = vmin.f32 %v414, %v615
        %v640 = vmin.f32 %v414, %v619
        %v641 = vmin.f32 %v414, %v623
        %v642 = vmin.f32 %v414, %v627
        %v643 = vmin.f32 %v414, %v631
        %v644 = vmin.f32 %v414, %v635
        %v653 = vlaneseq
        %v654 = vshrl.u32 %v653, 7
        %v655 = vsub.s32 0, %v654
        %v656 = vrot.slane %v517, %v655
        %v657 = vlaneseq
        %v658 = vshrl.u32 %v657, 7
        %v659 = vsub.s32 0, %v658
        %v660 = vrot.slane %v518, %v659
        %v661 = vlaneseq
        %v662 = vshrl.u32 %v661, 7
        %v663 = vsub.s32 0, %v662
        %v664 = vrot.slane %v519, %v663
        %v665 = vlaneseq
        %v666 = vshrl.u32 %v665, 7
        %v667 = vsub.s32 0, %v666
        %v668 = vrot.slane %v520, %v667
        %v669 = vlaneseq
        %v670 = vshrl.u32 %v669, 7
        %v671 = vsub.s32 0, %v670
        %v672 = vrot.slane %v521, %v671
        %v673 = vlaneseq
        %v674 = vshrl.u32 %v673, 7
        %v675 = vsub.s32 0, %v674
        %v676 = vrot.slane %v522, %v675
        %v677 = vlaneseq
        %v678 = vshrl.u32 %v677, 7
        %v679 = vsub.s32 0, %v678
        %v680 = vrot.slane %v523, %v679
        %v681 = vlaneseq
        %v682 = vshrl.u32 %v681, 7
        %v683 = vsub.s32 0, %v682
        %v684 = vrot.slane %v524, %v683
        %685 = vset.pattern.permute.xlu0 0
        %686 = vperm.xlu0 %685, %v656
        %v687 = vpop.permute.xlu0 %686
        %689 = vset.pattern.permute.xlu0 0
        %690 = vperm.xlu0 %689, %v660
        %v691 = vpop.permute.xlu0 %690
        %693 = vset.pattern.permute.xlu0 0
        %694 = vperm.xlu0 %693, %v664
        %v695 = vpop.permute.xlu0 %694
        %697 = vset.pattern.permute.xlu0 0
        %698 = vperm.xlu0 %697, %v668
        %v699 = vpop.permute.xlu0 %698
        %701 = vset.pattern.permute.xlu0 0
        %702 = vperm.xlu0 %701, %v672
        %v703 = vpop.permute.xlu0 %702
        %705 = vset.pattern.permute.xlu0 0
        %706 = vperm.xlu0 %705, %v676
        %v707 = vpop.permute.xlu0 %706
        %709 = vset.pattern.permute.xlu0 0
        %710 = vperm.xlu0 %709, %v680
        %v711 = vpop.permute.xlu0 %710
        %713 = vset.pattern.permute.xlu0 0
        %714 = vperm.xlu0 %713, %v684
        %v715 = vpop.permute.xlu0 %714
        %v717 = vmax.f32 %v413, %v687
        %v718 = vmax.f32 %v413, %v691
        %v719 = vmax.f32 %v413, %v695
        %v720 = vmax.f32 %v413, %v699
        %v721 = vmax.f32 %v413, %v703
        %v722 = vmax.f32 %v413, %v707
        %v723 = vmax.f32 %v413, %v711
        %v724 = vmax.f32 %v413, %v715
        %v725 = vsub.f32 %v637, %v717
        %v726 = vsub.f32 %v638, %v718
        %v727 = vsub.f32 %v639, %v719
        %v728 = vsub.f32 %v640, %v720
        %v729 = vsub.f32 %v641, %v721
        %v730 = vsub.f32 %v642, %v722
        %v731 = vsub.f32 %v643, %v723
        %v732 = vsub.f32 %v644, %v724
        %v733 = vmax.f32 %v725, 0.0
        %v734 = vmax.f32 %v726, 0.0
        %v735 = vmax.f32 %v727, 0.0
        %v736 = vmax.f32 %v728, 0.0
        %v737 = vmax.f32 %v729, 0.0
        %v738 = vmax.f32 %v730, 0.0
        %v739 = vmax.f32 %v731, 0.0
        %v740 = vmax.f32 %v732, 0.0
        %741 = vset.pattern.permute.xlu0 1
        %742 = vperm.xlu0 %741, %v576
        %v743 = vpop.permute.xlu0 %742
        %745 = vset.pattern.permute.xlu0 1
        %746 = vperm.xlu0 %745, %v580
        %v747 = vpop.permute.xlu0 %746
        %749 = vset.pattern.permute.xlu0 1
        %750 = vperm.xlu0 %749, %v584
        %v751 = vpop.permute.xlu0 %750
        %753 = vset.pattern.permute.xlu0 1
        %754 = vperm.xlu0 %753, %v588
        %v755 = vpop.permute.xlu0 %754
        %757 = vset.pattern.permute.xlu0 1
        %758 = vperm.xlu0 %757, %v592
        %v759 = vpop.permute.xlu0 %758
        %761 = vset.pattern.permute.xlu0 1
        %762 = vperm.xlu0 %761, %v596
        %v763 = vpop.permute.xlu0 %762
        %765 = vset.pattern.permute.xlu0 1
        %766 = vperm.xlu0 %765, %v600
        %v767 = vpop.permute.xlu0 %766
        %769 = vset.pattern.permute.xlu0 1
        %770 = vperm.xlu0 %769, %v604
        %v771 = vpop.permute.xlu0 %770
        %v773 = vmin.f32 %v417, %v743
        %v774 = vmin.f32 %v417, %v747
        %v775 = vmin.f32 %v417, %v751
        %v776 = vmin.f32 %v417, %v755
        %v777 = vmin.f32 %v417, %v759
        %v778 = vmin.f32 %v417, %v763
        %v779 = vmin.f32 %v417, %v767
        %v780 = vmin.f32 %v417, %v771
        %781 = vset.pattern.permute.xlu0 1
        %782 = vperm.xlu0 %781, %v656
        %v783 = vpop.permute.xlu0 %782
        %785 = vset.pattern.permute.xlu0 1
        %786 = vperm.xlu0 %785, %v660
        %v787 = vpop.permute.xlu0 %786
        %789 = vset.pattern.permute.xlu0 1
        %790 = vperm.xlu0 %789, %v664
        %v791 = vpop.permute.xlu0 %790
        %793 = vset.pattern.permute.xlu0 1
        %794 = vperm.xlu0 %793, %v668
        %v795 = vpop.permute.xlu0 %794
        %797 = vset.pattern.permute.xlu0 1
        %798 = vperm.xlu0 %797, %v672
        %v799 = vpop.permute.xlu0 %798
        %801 = vset.pattern.permute.xlu0 1
        %802 = vperm.xlu0 %801, %v676
        %v803 = vpop.permute.xlu0 %802
        %805 = vset.pattern.permute.xlu0 1
        %806 = vperm.xlu0 %805, %v680
        %v807 = vpop.permute.xlu0 %806
        %809 = vset.pattern.permute.xlu0 1
        %810 = vperm.xlu0 %809, %v684
        %v811 = vpop.permute.xlu0 %810
        %v813 = vmax.f32 %v416, %v783
        %v814 = vmax.f32 %v416, %v787
        %v815 = vmax.f32 %v416, %v791
        %v816 = vmax.f32 %v416, %v795
        %v817 = vmax.f32 %v416, %v799
        %v818 = vmax.f32 %v416, %v803
        %v819 = vmax.f32 %v416, %v807
        %v820 = vmax.f32 %v416, %v811
        %v821 = vsub.f32 %v773, %v813
        %v822 = vsub.f32 %v774, %v814
        %v823 = vsub.f32 %v775, %v815
        %v824 = vsub.f32 %v776, %v816
        %v825 = vsub.f32 %v777, %v817
        %v826 = vsub.f32 %v778, %v818
        %v827 = vsub.f32 %v779, %v819
        %v828 = vsub.f32 %v780, %v820
        %v829 = vmax.f32 %v821, 0.0
        %v830 = vmax.f32 %v822, 0.0
        %v831 = vmax.f32 %v823, 0.0
        %v832 = vmax.f32 %v824, 0.0
        %v833 = vmax.f32 %v825, 0.0
        %v834 = vmax.f32 %v826, 0.0
        %v835 = vmax.f32 %v827, 0.0
        %v836 = vmax.f32 %v828, 0.0
        %v837 = vmul.f32 %v733, %v829
        %v838 = vmul.f32 %v734, %v830
        %v839 = vmul.f32 %v735, %v831
        %v840 = vmul.f32 %v736, %v832
        %v841 = vmul.f32 %v737, %v833
        %v842 = vmul.f32 %v738, %v834
        %v843 = vmul.f32 %v739, %v835
        %v844 = vmul.f32 %v740, %v836
        %v853 = vlaneseq
        %v854 = vshrl.u32 %v853, 7
        %v855 = vsub.s32 0, %v854
        %v856 = vrot.slane %v557, %v855
        %v857 = vlaneseq
        %v858 = vshrl.u32 %v857, 7
        %v859 = vsub.s32 0, %v858
        %v860 = vrot.slane %v558, %v859
        %v861 = vlaneseq
        %v862 = vshrl.u32 %v861, 7
        %v863 = vsub.s32 0, %v862
        %v864 = vrot.slane %v559, %v863
        %v865 = vlaneseq
        %v866 = vshrl.u32 %v865, 7
        %v867 = vsub.s32 0, %v866
        %v868 = vrot.slane %v560, %v867
        %v869 = vlaneseq
        %v870 = vshrl.u32 %v869, 7
        %v871 = vsub.s32 0, %v870
        %v872 = vrot.slane %v561, %v871
        %v873 = vlaneseq
        %v874 = vshrl.u32 %v873, 7
        %v875 = vsub.s32 0, %v874
        %v876 = vrot.slane %v562, %v875
        %v877 = vlaneseq
        %v878 = vshrl.u32 %v877, 7
        %v879 = vsub.s32 0, %v878
        %v880 = vrot.slane %v563, %v879
        %v881 = vlaneseq
        %v882 = vshrl.u32 %v881, 7
        %v883 = vsub.s32 0, %v882
        %v884 = vrot.slane %v564, %v883
        %885 = vset.pattern.permute.xlu0 2
        %886 = vperm.xlu0 %885, %v856
        %v887 = vpop.permute.xlu0 %886
        %889 = vset.pattern.permute.xlu0 2
        %890 = vperm.xlu0 %889, %v860
        %v891 = vpop.permute.xlu0 %890
        %893 = vset.pattern.permute.xlu0 2
        %894 = vperm.xlu0 %893, %v864
        %v895 = vpop.permute.xlu0 %894
        %897 = vset.pattern.permute.xlu0 2
        %898 = vperm.xlu0 %897, %v868
        %v899 = vpop.permute.xlu0 %898
        %901 = vset.pattern.permute.xlu0 2
        %902 = vperm.xlu0 %901, %v872
        %v903 = vpop.permute.xlu0 %902
        %905 = vset.pattern.permute.xlu0 2
        %906 = vperm.xlu0 %905, %v876
        %v907 = vpop.permute.xlu0 %906
        %909 = vset.pattern.permute.xlu0 2
        %910 = vperm.xlu0 %909, %v880
        %v911 = vpop.permute.xlu0 %910
        %913 = vset.pattern.permute.xlu0 2
        %914 = vperm.xlu0 %913, %v884
        %v915 = vpop.permute.xlu0 %914
        %v917 = vadd.f32 %v418, %v887
        %v918 = vadd.f32 %v418, %v891
        %v919 = vadd.f32 %v418, %v895
        %v920 = vadd.f32 %v418, %v899
        %v921 = vadd.f32 %v418, %v903
        %v922 = vadd.f32 %v418, %v907
        %v923 = vadd.f32 %v418, %v911
        %v924 = vadd.f32 %v418, %v915
        %v925 = vsub.f32 %v917, %v837
        %v926 = vsub.f32 %v918, %v838
        %v927 = vsub.f32 %v919, %v839
        %v928 = vsub.f32 %v920, %v840
        %v929 = vsub.f32 %v921, %v841
        %v930 = vsub.f32 %v922, %v842
        %v931 = vsub.f32 %v923, %v843
        %v932 = vsub.f32 %v924, %v844
        %v933 = vmul.f32 %v925, 0.5
        %v934 = vmul.f32 %v926, 0.5
        %v935 = vmul.f32 %v927, 0.5
        %v936 = vmul.f32 %v928, 0.5
        %v937 = vmul.f32 %v929, 0.5
        %v938 = vmul.f32 %v930, 0.5
        %v939 = vmul.f32 %v931, 0.5
        %v940 = vmul.f32 %v932, 0.5
        %vm941 = vcmp.gt.f32.partialorder %v837, %v933
        %vm942 = vcmp.gt.f32.partialorder %v838, %v934
        %vm943 = vcmp.gt.f32.partialorder %v839, %v935
        %vm944 = vcmp.gt.f32.partialorder %v840, %v936
        %vm945 = vcmp.gt.f32.partialorder %v841, %v937
        %vm946 = vcmp.gt.f32.partialorder %v842, %v938
        %vm947 = vcmp.gt.f32.partialorder %v843, %v939
        %vm948 = vcmp.gt.f32.partialorder %v844, %v940
        %v949 = vsel %vm941, 1.0, 0.0
        %v950 = vsel %vm942, 1.0, 0.0
        %v951 = vsel %vm943, 1.0, 0.0
        %v952 = vsel %vm944, 1.0, 0.0
        %v953 = vsel %vm945, 1.0, 0.0
        %v954 = vsel %vm946, 1.0, 0.0
        %v955 = vsel %vm947, 1.0, 0.0
        %v956 = vsel %vm948, 1.0, 0.0
        %vm957 = vcmask 1041408
        %v958 = vsel %vm957, %v949, -inf
        %v959 = vsel %vm957, %v950, -inf
        %v960 = vsel %vm957, %v951, -inf
        %v961 = vsel %vm957, %v952, -inf
        %v962 = vsel %vm957, %v953, -inf
        %v963 = vmax.f32 %v958, %v962
        %v964 = vsel %vm957, %v954, -inf
        %v965 = vmax.f32 %v959, %v964
        %v966 = vsel %vm957, %v955, -inf
        %v967 = vmax.f32 %v960, %v966
        %v968 = vsel %vm957, %v956, -inf
        %v969 = vmax.f32 %v961, %v968
        %v970 = vmax.f32 %v963, %v965
        %v971 = vmax.f32 %v967, %v969
        %v972 = vmax.f32 %v970, %v971
        %vm973 = vcmp.gt.f32.partialorder %v972, 0.0
        %v974 = vsel %vm973, 0.0, %v361
        %v975 = vmul.f32 %v367, %v368
        %v976 = vsub.f32 2.0, %v975
        %v977 = vmax.f32 %v345, 0.0
        %v978 = vmul.f32 %v345, %v362
        %v979 = vsub.f32 %v977, %v978
        %v980 = vand.u32 2147483647, %v345
        %v981 = vsub.f32 0.0, %v980
        %v982 = vmul.f32 %v981, 1.442695
        %v983 = vpow.pop %v982
        %v984 = vadd.f32 %v983, 1.0
        %v985 = vlog2.pop %v984
        %v986 = vmul.f32 %v985, 0.6931472
        %v987 = vadd.f32 %v979, %v986
        %v988 = vmul.f32 %v987, %v976
        %v989 = vmul.f32 %v988, %v360
        %v990 = vmax.f32 %v346, 0.0
        %v991 = vmul.f32 %v346, %v363
        %v992 = vsub.f32 %v990, %v991
        %v993 = vand.u32 2147483647, %v346
        %v994 = vsub.f32 0.0, %v993
        %v995 = vmul.f32 %v994, 1.442695
        %v996 = vpow.pop %v995
        %v997 = vadd.f32 %v996, 1.0
        %v998 = vlog2.pop %v997
        %v999 = vmul.f32 %v998, 0.6931472
        %v1000 = vadd.f32 %v992, %v999
        %v1001 = vmul.f32 %v1000, %v976
        %v1002 = vmul.f32 %v1001, %v360
        %v1003 = vsub.f32 %v347, %v364
        %v1004 = vmul.f32 %v1003, %v1003
        %v1005 = vmul.f32 %v1004, 0.5
        %v1006 = vmul.f32 %v1005, %v976
        %v1007 = vmul.f32 %v1006, %v360
        %v1008 = vsub.f32 %v348, %v365
        %v1009 = vmul.f32 %v1008, %v1008
        %v1010 = vmul.f32 %v1009, 0.5
        %v1011 = vmul.f32 %v1010, %v976
        %v1012 = vmul.f32 %v1011, %v360
        %v1013 = vmax.f32 %v349, 0.0
        %v1014 = vmul.f32 %v349, %v360
        %v1015 = vsub.f32 %v1013, %v1014
        %v1016 = vand.u32 2147483647, %v349
        %v1017 = vsub.f32 0.0, %v1016
        %v1018 = vmul.f32 %v1017, 1.442695
        %v1019 = vpow.pop %v1018
        %v1020 = vadd.f32 %v1019, 1.0
        %v1021 = vlog2.pop %v1020
        %v1022 = vmul.f32 %v1021, 0.6931472
        %v1023 = vadd.f32 %v1015, %v1022
        %v1024 = vadd.f32 %v360, %v974
        %v1025 = vmul.f32 %v1023, %v1024
        %v1026 = vmax.f32 %v350, 0.0
        %v1027 = vmul.f32 %v350, %v366
        %v1028 = vsub.f32 %v1026, %v1027
        %v1029 = vand.u32 2147483647, %v350
        %v1030 = vsub.f32 0.0, %v1029
        %v1031 = vmul.f32 %v1030, 1.442695
        %v1032 = vpow.pop %v1031
        %v1033 = vadd.f32 %v1032, 1.0
        %v1034 = vlog2.pop %v1033
        %v1035 = vmul.f32 %v1034, 0.6931472
        %v1036 = vadd.f32 %v1028, %v1035
        %v1037 = vadd.f32 %v1036, 0.0
        %v1038 = vmul.f32 %v1037, %v360
        %v1039 = vsub.f32 %v383, %v369
        %v1040 = vsub.f32 %v384, %v370
        %v1041 = vsub.f32 %v385, %v371
        %v1042 = vmul.f32 %v1039, %v1039
        %v1043 = vmul.f32 %v1040, %v1040
        %v1044 = vmul.f32 %v1041, %v1041
        %v1045 = vsel %vm957, %v1042, 0.0
        %v1046 = vsel %vm957, %v1043, 0.0
        %v1047 = vadd.f32 %v1045, %v1046
        %v1048 = vsel %vm957, %v1044, 0.0
        %v1049 = vadd.f32 %v1047, %v1048
        %v1050 = vrsqrt.pop %v1049
        %v1051 = vmul.f32 %v1049, %v1050
        %vm1052 = vcmp.eq.f32.partialorder %v1049, inf
        %v1053 = vsel %vm1052, %v1049, %v1051
        %vm1054 = vcmp.eq.f32.partialorder %v1049, 0.0
        %v1055 = vand.u32 %v1049, 2147483648
        %v1056 = vsel %vm1054, %v1055, %v1053
        %v1057 = vmul.f32 %v1056, %v360
        %v1058 = vsub.f32 %v386, %v372
        %v1059 = vsub.f32 %v387, %v373
        %v1060 = vsub.f32 %v388, %v374
        %v1061 = vmul.f32 %v1058, %v1058
        %v1062 = vmul.f32 %v1059, %v1059
        %v1063 = vmul.f32 %v1060, %v1060
        %v1064 = vsel %vm957, %v1061, 0.0
        %v1065 = vsel %vm957, %v1062, 0.0
        %v1066 = vadd.f32 %v1064, %v1065
        %v1067 = vsel %vm957, %v1063, 0.0
        %v1068 = vadd.f32 %v1066, %v1067
        %v1069 = vrsqrt.pop %v1068
        %v1070 = vmul.f32 %v1068, %v1069
        %vm1071 = vcmp.eq.f32.partialorder %v1068, inf
        %v1072 = vsel %vm1071, %v1068, %v1070
        %vm1073 = vcmp.eq.f32.partialorder %v1068, 0.0
        %v1074 = vand.u32 %v1068, 2147483648
        %v1075 = vsel %vm1073, %v1074, %v1072
        %v1076 = vmul.f32 %v1075, %v360
        %v1077 = vsub.f32 %v389, %v375
        %v1078 = vsub.f32 %v390, %v376
        %v1079 = vsub.f32 %v391, %v377
        %v1080 = vmul.f32 %v1077, %v1077
        %v1081 = vmul.f32 %v1078, %v1078
        %v1082 = vmul.f32 %v1079, %v1079
        %v1083 = vsel %vm957, %v1080, 0.0
        %v1084 = vsel %vm957, %v1081, 0.0
        %v1085 = vadd.f32 %v1083, %v1084
        %v1086 = vsel %vm957, %v1082, 0.0
        %v1087 = vadd.f32 %v1085, %v1086
        %v1088 = vrsqrt.pop %v1087
        %v1089 = vmul.f32 %v1087, %v1088
        %vm1090 = vcmp.eq.f32.partialorder %v1087, inf
        %v1091 = vsel %vm1090, %v1087, %v1089
        %vm1092 = vcmp.eq.f32.partialorder %v1087, 0.0
        %v1093 = vand.u32 %v1087, 2147483648
        %v1094 = vsel %vm1092, %v1093, %v1091
        %v1095 = vmul.f32 %v1094, %v360
        %v1096 = vmul.f32 %v383, %v386
        %v1097 = vmul.f32 %v384, %v387
        %v1098 = vmul.f32 %v385, %v388
        %v1099 = vsel %vm957, %v1096, 0.0
        %v1100 = vsel %vm957, %v1097, 0.0
        %v1101 = vadd.f32 %v1099, %v1100
        %v1102 = vsel %vm957, %v1098, 0.0
        %v1103 = vadd.f32 %v1101, %v1102
        %v1104 = vand.u32 2147483647, %v1103
        %v1105 = vmul.f32 %v386, %v389
        %v1106 = vmul.f32 %v387, %v390
        %v1107 = vmul.f32 %v388, %v391
        %v1108 = vsel %vm957, %v1105, 0.0
        %v1109 = vsel %vm957, %v1106, 0.0
        %v1110 = vadd.f32 %v1108, %v1109
        %v1111 = vsel %vm957, %v1107, 0.0
        %v1112 = vadd.f32 %v1110, %v1111
        %v1113 = vand.u32 2147483647, %v1112
        %v1114 = vadd.f32 %v1104, %v1113
        %v1115 = vmul.f32 %v389, %v383
        %v1116 = vmul.f32 %v390, %v384
        %v1117 = vmul.f32 %v391, %v385
        %v1118 = vsel %vm957, %v1115, 0.0
        %v1119 = vsel %vm957, %v1116, 0.0
        %v1120 = vadd.f32 %v1118, %v1119
        %v1121 = vsel %vm957, %v1117, 0.0
        %v1122 = vadd.f32 %v1120, %v1121
        %v1123 = vand.u32 2147483647, %v1122
        %v1124 = vadd.f32 %v1114, %v1123
        %v1125 = vmul.f32 %v1124, %v360
        %v1126 = vld [vmem:[%s324] sm:$0x1]
        %v1127 = vsel %vm957, %v989, 0.0
        %v1128 = vrot.slane %v1127, 4
        %v1129 = vadd.f32 %v1127, %v1128
        %v1130 = vrot.slane %v1129, 2
        %v1131 = vadd.f32 %v1129, %v1130
        %v1132 = vrot.slane %v1131, 1
        %v1133 = vadd.f32 %v1131, %v1132
        %v1134 = vadd.f32 %v1126, %v1133
        %1135 = vst [vmem:[%s324] sm:$0x1] %v1134
        %v1136 = vld [vmem:[%s324 + $0x1] sm:$0x1]
        %v1137 = vsel %vm957, %v1002, 0.0
        %v1138 = vrot.slane %v1137, 4
        %v1139 = vadd.f32 %v1137, %v1138
        %v1140 = vrot.slane %v1139, 2
        %v1141 = vadd.f32 %v1139, %v1140
        %v1142 = vrot.slane %v1141, 1
        %v1143 = vadd.f32 %v1141, %v1142
        %v1144 = vadd.f32 %v1136, %v1143
        %1145 = vst [vmem:[%s324 + $0x1] sm:$0x1] %v1144
        %v1146 = vld [vmem:[%s324 + $0x2] sm:$0x1]
        %v1147 = vsel %vm957, %v1007, 0.0
        %v1148 = vrot.slane %v1147, 4
        %v1149 = vadd.f32 %v1147, %v1148
        %v1150 = vrot.slane %v1149, 2
        %v1151 = vadd.f32 %v1149, %v1150
        %v1152 = vrot.slane %v1151, 1
        %v1153 = vadd.f32 %v1151, %v1152
        %v1154 = vadd.f32 %v1146, %v1153
        %1155 = vst [vmem:[%s324 + $0x2] sm:$0x1] %v1154
        %v1156 = vld [vmem:[%s324 + $0x3] sm:$0x1]
        %v1157 = vsel %vm957, %v1012, 0.0
        %v1158 = vrot.slane %v1157, 4
        %v1159 = vadd.f32 %v1157, %v1158
        %v1160 = vrot.slane %v1159, 2
        %v1161 = vadd.f32 %v1159, %v1160
        %v1162 = vrot.slane %v1161, 1
        %v1163 = vadd.f32 %v1161, %v1162
        %v1164 = vadd.f32 %v1156, %v1163
        %1165 = vst [vmem:[%s324 + $0x3] sm:$0x1] %v1164
        %v1166 = vld [vmem:[%s324 + $0x4] sm:$0x1]
        %v1167 = vsel %vm957, %v1025, 0.0
        %v1168 = vrot.slane %v1167, 4
        %v1169 = vadd.f32 %v1167, %v1168
        %v1170 = vrot.slane %v1169, 2
        %v1171 = vadd.f32 %v1169, %v1170
        %v1172 = vrot.slane %v1171, 1
        %v1173 = vadd.f32 %v1171, %v1172
        %v1174 = vadd.f32 %v1166, %v1173
        %1175 = vst [vmem:[%s324 + $0x4] sm:$0x1] %v1174
        %v1176 = vld [vmem:[%s324 + $0x5] sm:$0x1]
        %v1177 = vsel %vm957, %v1038, 0.0
        %v1178 = vrot.slane %v1177, 4
        %v1179 = vadd.f32 %v1177, %v1178
        %v1180 = vrot.slane %v1179, 2
        %v1181 = vadd.f32 %v1179, %v1180
        %v1182 = vrot.slane %v1181, 1
        %v1183 = vadd.f32 %v1181, %v1182
        %v1184 = vadd.f32 %v1176, %v1183
        %1185 = vst [vmem:[%s324 + $0x5] sm:$0x1] %v1184
        %v1186 = vld [vmem:[%s324 + $0x6] sm:$0x1]
        %v1187 = vsel %vm957, %v1057, 0.0
        %v1188 = vrot.slane %v1187, 4
        %v1189 = vadd.f32 %v1187, %v1188
        %v1190 = vrot.slane %v1189, 2
        %v1191 = vadd.f32 %v1189, %v1190
        %v1192 = vrot.slane %v1191, 1
        %v1193 = vadd.f32 %v1191, %v1192
        %v1194 = vadd.f32 %v1186, %v1193
        %1195 = vst [vmem:[%s324 + $0x6] sm:$0x1] %v1194
        %v1196 = vld [vmem:[%s324 + $0x7] sm:$0x1]
        %v1197 = vsel %vm957, %v1076, 0.0
        %v1198 = vrot.slane %v1197, 4
        %v1199 = vadd.f32 %v1197, %v1198
        %v1200 = vrot.slane %v1199, 2
        %v1201 = vadd.f32 %v1199, %v1200
        %v1202 = vrot.slane %v1201, 1
        %v1203 = vadd.f32 %v1201, %v1202
        %v1204 = vadd.f32 %v1196, %v1203
        %1205 = vst [vmem:[%s324 + $0x7] sm:$0x1] %v1204
        %v1206 = vld [vmem:[%s324 + $0x8] sm:$0x1]
        %v1207 = vsel %vm957, %v1095, 0.0
        %v1208 = vrot.slane %v1207, 4
        %v1209 = vadd.f32 %v1207, %v1208
        %v1210 = vrot.slane %v1209, 2
        %v1211 = vadd.f32 %v1209, %v1210
        %v1212 = vrot.slane %v1211, 1
        %v1213 = vadd.f32 %v1211, %v1212
        %v1214 = vadd.f32 %v1206, %v1213
        %1215 = vst [vmem:[%s324 + $0x8] sm:$0x1] %v1214
        %v1216 = vld [vmem:[%s324 + $0x9] sm:$0x1]
        %v1217 = vsel %vm957, %v1125, 0.0
        %v1218 = vrot.slane %v1217, 4
        %v1219 = vadd.f32 %v1217, %v1218
        %v1220 = vrot.slane %v1219, 2
        %v1221 = vadd.f32 %v1219, %v1220
        %v1222 = vrot.slane %v1221, 1
        %v1223 = vadd.f32 %v1221, %v1222
        %v1224 = vadd.f32 %v1216, %v1223
        %1225 = vst [vmem:[%s324 + $0x9] sm:$0x1] %v1224
        %v1226 = vld [vmem:[%s324 + $0xa] sm:$0x1]
        %v1227 = vsel %vm957, %v360, 0.0
        %v1228 = vrot.slane %v1227, 4
        %v1229 = vadd.f32 %v1227, %v1228
        %v1230 = vrot.slane %v1229, 2
        %v1231 = vadd.f32 %v1229, %v1230
        %v1232 = vrot.slane %v1231, 1
        %v1233 = vadd.f32 %v1231, %v1232
        %v1234 = vadd.f32 %v1226, %v1233
        %1235 = vst [vmem:[%s324 + $0xa] sm:$0x1] %v1234
        %s1236 = sand.u32 %s165, 1
        %s1237 = scalar_lea.sflag [#allocation4], %s1236
        %s1238 = sand.u32 %s165, 1
        %s1239 = smul.addr %s1238, 16
        %s1240 = scalar_lea.vmem [#allocation7], %s1239
        // Predicated region
        $region49: #{tpu_custom_call.1} parent=35 // pred_check
          %p1241 = pneg %p175
        $region50: #{tpu_custom_call.1} parent=35 // pred_check_branch
          %1243 = sbr.rel (%p1241) target = $region52
        $region51: #{tpu_custom_call.1} parent=35 // pred_region
          %s1245 = ssub.s32 256, 256
          %1246 = vsyncadd %s1237, %s1245
          %s1247 = smul.addr %s29, 2
          %s1248 = smul.addr %s1247, 128
          %s1249 = scalar_lea.hbm %s4, %s1248
          %s1250 = sshll.u32 %s1240, 4
          %s1251 = int_to_ptr.vmem [resolvable:$true] %s1250
          %1256 = dma.vmem_to_hbm [thread:$0]  %s1251, 256, %s1249, %s1237, 128, 128, 8
        $region52: #{tpu_custom_call.1} parent=35 // pred_fallthru
          _
      $region36: #{tpu_custom_call.1} parent=5 // pred_fallthru
        _
      %p1257 = scmp.le.s32.totalorder 2, %s19
      // Predicated region
      $region53: #{tpu_custom_call.1} parent=5 // pred_check
        %p1258 = pneg %p1257
      $region54: #{tpu_custom_call.1} parent=5 // pred_check_branch
        %1260 = sbr.rel (%p1258) target = $region56
      $region55: #{tpu_custom_call.1} parent=5 // pred_region
        %s1261 = ssub.s32 %s19, 2
        // Predicated region
        $region57: #{tpu_custom_call.1} parent=55 // pred_check
          %p1262 = pneg %p181
        $region58: #{tpu_custom_call.1} parent=55 // pred_check_branch
          %1264 = sbr.rel (%p1262) target = $region60
        $region59: #{tpu_custom_call.1} parent=55 // pred_region
          %s1265 = sand.u32 %s166, 1
          %s1266 = scalar_lea.sflag [#allocation4], %s1265
          %s1267 = sand.u32 %s166, 1
          %s1268 = smul.addr %s1267, 16
          %s1269 = scalar_lea.vmem [#allocation7], %s1268
          %1270 = dma.done %s1266, 256
        $region60: #{tpu_custom_call.1} parent=55 // pred_fallthru
          _
      $region56: #{tpu_custom_call.1} parent=5 // pred_fallthru
        _
    $region6: #{tpu_custom_call.1} parent=1 // loop_footer
      %s23 = sadd.s32 1, %s19
    $region7: #{tpu_custom_call.1} parent=1 // loop_footer_branch
      %18 = sbr.rel target = $region3
    $region8: #{tpu_custom_call.1} parent=1 // loop_exit
      _
    %1271 = vsyncpa [#allocation3], 1
    %s1272 = scalar_lea.sflag [#allocation3], 1
    %1273 = vsyncpa %s1272, 1
    %1274 = vsyncpa [#allocation6], 1
    %s1275 = scalar_lea.sflag [#allocation6], 1
    %1276 = vsyncpa %s1275, 1
    %1277 = vsyncpa [#allocation4], 1
    %s1278 = scalar_lea.sflag [#allocation4], 1
    %1279 = vsyncpa %s1278, 1

</llo_original>
